<compile_context>
chip_gen: v6e
topology: v6e:2x2x1
jax: 0.10.0
libtpu: 0.0.40
codegen_flags: <defaults>
</compile_context>

<pallas_src>
import math
import jax
import jax.numpy as jnp
from jax.experimental import pallas as pl
from jax.experimental.pallas import tpu as pltpu  # noqa: F401  (imported per spec)

# ---- synthetic model config (small, consistent with a BERT-style encoder) ----
VOCAB = 100
HIDDEN = 32
NUM_HEADS = 2
HEAD_DIM = HIDDEN // NUM_HEADS
INTERMEDIATE = 64
NUM_LABELS = 7          # len(train_label_mapping) -- synthetic label set size
SEQ = 8
BATCH = 2
LN_EPS = 1e-12

# lane-dense padded widths (TPU lane width = 128)
HPAD = 128              # hidden 32  -> 128
IPAD = 128              # intermediate 64 -> 128
VPAD = 128              # vocab 100 -> 128
LPAD = 128              # labels 7  -> 128
OUT_ROWS = 8            # output sublane-padded to a full (8,128) tile

# ---- packed "aux" (f32, (POS_OFF + B*S, 128)) row layout ----------------------
EMB_G, EMB_B = 0, 1
LN1_G, LN1_B = 2, 3
LN2_G, LN2_B = 4, 5
B_O, B_I, B_F = 6, 7, 8
POOL_B, CLS_B = 9, 10
BQ0, BK0, BV0 = 11, 13, 15          # + head index
POS_OFF = 24                        # rows POS_OFF .. POS_OFF+B*S-1: pos+type embeddings

# ---- packed weight stack (bf16, (N_MATS, 128, 128)) plane layout --------------
W_EMB = 0
WQ0, WK0, WV0, WO0 = 1, 3, 5, 7     # + head index
W_I, W_F, W_POOL, W_CLS = 9, 10, 11, 12
N_MATS = 13


# --------------------------- fused Pallas kernel ------------------------------
def _make_fused_bert_kernel(B, S):
    BS = B * S
    scale = 1.0 / math.sqrt(HEAD_DIM)
    gelu_c = math.sqrt(2.0 / math.pi)
    f32 = jnp.float32
    bf16 = jnp.bfloat16

    def kernel(ids_ref, amask_ref, aux_ref, w_ref, out_ref):
        # lane mask: 1.0 on the first HIDDEN lanes, 0.0 on the padding lanes.
        lane = jax.lax.broadcasted_iota(jnp.int32, (1, HPAD), 1)
        hmask = (lane < HIDDEN).astype(f32)

        def vec(i):                                   # (1, 128) parameter row
            return aux_ref[i:i + 1, :]

        def layernorm(x, g_row, b_row):
            # x is zero in padded lanes, so sums over 128 lanes == sums over HIDDEN.
            mu = jnp.sum(x, axis=-1, keepdims=True) * (1.0 / HIDDEN)
            xc = (x - mu) * hmask
            var = jnp.sum(xc * xc, axis=-1, keepdims=True) * (1.0 / HIDDEN)
            return xc * jax.lax.rsqrt(var + LN_EPS) * vec(g_row) + vec(b_row)

        # ---- embeddings: one-hot gather on the MXU + (pos+type) rows + LN ----
        ids = ids_ref[...]                                        # (BS, 1) int32
        vocab_iota = jax.lax.broadcasted_iota(jnp.int32, (BS, VPAD), 1)
        onehot = (ids == vocab_iota).astype(bf16)                 # (BS, VPAD)
        emb = jnp.dot(onehot, w_ref[W_EMB], preferred_element_type=f32)
        emb = emb + aux_ref[POS_OFF:POS_OFF + BS, :]              # pos+type, f32
        h = layernorm(emb, EMB_G, EMB_B)                          # (BS, HPAD)

        # additive (BS, BS) mask: block-diagonal batches + masked key positions
        amask = amask_ref[...]                                    # (BS, BS) f32

        # ---- multi-head attention: lane-aligned 128-wide head blocks ----------
        h_bf = h.astype(bf16)
        attn_out = jnp.zeros((BS, HPAD), f32)
        for hh in range(NUM_HEADS):                               # statically unrolled
            q = jnp.dot(h_bf, w_ref[WQ0 + hh], preferred_element_type=f32) + vec(BQ0 + hh)
            k = jnp.dot(h_bf, w_ref[WK0 + hh], preferred_element_type=f32) + vec(BK0 + hh)
            v = jnp.dot(h_bf, w_ref[WV0 + hh], preferred_element_type=f32) + vec(BV0 + hh)
            s = jax.lax.dot_general(q, k, (((1,), (1,)), ((), ())),
                                    preferred_element_type=f32)   # (BS, BS)
            s = s * scale + amask
            s = s - jnp.max(s, axis=-1, keepdims=True)
            p = jnp.exp(s)
            p = p * pl.reciprocal(jnp.sum(p, axis=-1, keepdims=True), approx=True)
            ctx = jnp.dot(p, v, preferred_element_type=f32)       # (BS, 128)
            # fold head back through its Wo block (padded rows of Wo_h are zero)
            attn_out = attn_out + jnp.dot(ctx.astype(bf16), w_ref[WO0 + hh],
                                          preferred_element_type=f32)
        attn_out = attn_out + vec(B_O)
        h = layernorm(h + attn_out, LN1_G, LN1_B)

        # ---- feed-forward (GELU, tanh approximation) --------------------------
        # TODO(synk): HF BERT defaults to exact erf-GELU; tanh approx differs ~1e-3.
        inter = jnp.dot(h.astype(bf16), w_ref[W_I], preferred_element_type=f32) + vec(B_I)
        inter = 0.5 * inter * (1.0 + jnp.tanh(
            gelu_c * (inter + 0.044715 * inter * inter * inter)))
        ffn_out = jnp.dot(inter.astype(bf16), w_ref[W_F],
                          preferred_element_type=f32) + vec(B_F)
        h = layernorm(h + ffn_out, LN2_G, LN2_B)

        # ---- pooler on [CLS] tokens via one-hot row-selection matmul ----------
        r_sel = jax.lax.broadcasted_iota(jnp.int32, (OUT_ROWS, BS), 0)
        c_sel = jax.lax.broadcasted_iota(jnp.int32, (OUT_ROWS, BS), 1)
        sel = ((c_sel == r_sel * S) & (r_sel < B)).astype(bf16)   # (8, BS)
        cls_tok = jnp.dot(sel, h.astype(bf16), preferred_element_type=f32)
        pooled = jnp.tanh(jnp.dot(cls_tok.astype(bf16), w_ref[W_POOL],
                                  preferred_element_type=f32) + vec(POOL_B))

        # dropout(p=0.2): identity at inference time.
        # TODO(synk): training-mode dropout would need pltpu.prng_seed/prng_random_bits.
        logits = jnp.dot(pooled.astype(bf16), w_ref[W_CLS],
                         preferred_element_type=f32) + vec(CLS_B)
        out_ref[...] = logits                                     # full (8,128) tile

    return kernel


# ------------------------------ parameters ------------------------------------
def init_params(key):
    ks = jax.random.split(key, 16)
    w = lambda k, shape: (0.02 * jax.random.normal(k, shape)).astype(jnp.float32)
    zeros_row = lambda n: jnp.zeros((1, n), jnp.float32)
    ones_row = lambda n: jnp.ones((1, n), jnp.float32)
    return {
        # embeddings
        "word_emb": w(ks[0], (VOCAB, HIDDEN)),
        "pos_emb": w(ks[1], (SEQ, HIDDEN)),
        "type_emb": w(ks[2], (2, HIDDEN)),
        "emb_ln_g": ones_row(HIDDEN), "emb_ln_b": zeros_row(HIDDEN),
        # self-attention
        "wq": w(ks[3], (HIDDEN, HIDDEN)), "bq": zeros_row(HIDDEN),
        "wk": w(ks[4], (HIDDEN, HIDDEN)), "bk": zeros_row(HIDDEN),
        "wv": w(ks[5], (HIDDEN, HIDDEN)), "bv": zeros_row(HIDDEN),
        "wo": w(ks[6], (HIDDEN, HIDDEN)), "bo": zeros_row(HIDDEN),
        "attn_ln_g": ones_row(HIDDEN), "attn_ln_b": zeros_row(HIDDEN),
        # feed-forward
        "wi": w(ks[7], (HIDDEN, INTERMEDIATE)), "bi": zeros_row(INTERMEDIATE),
        "wf": w(ks[8], (INTERMEDIATE, HIDDEN)), "bf": zeros_row(HIDDEN),
        "ffn_ln_g": ones_row(HIDDEN), "ffn_ln_b": zeros_row(HIDDEN),
        # pooler
        "pool_w": w(ks[9], (HIDDEN, HIDDEN)), "pool_b": zeros_row(HIDDEN),
        # classifier head (BertClassifier.classifier)
        "cls_w": w(ks[10], (HIDDEN, NUM_LABELS)), "cls_b": zeros_row(NUM_LABELS),
    }


def prepare_packed_params(params, B, S):
    """One-time pack: all vectors -> one (POS_OFF+B*S, 128) f32 array; all matrices
    (per-head lane-aligned QKV / Wo splits) -> one (13, 128, 128) bf16 stack."""
    BS = B * S

    aux = jnp.zeros((POS_OFF + BS, 128), jnp.float32)
    aux = aux.at[EMB_G, :HIDDEN].set(params["emb_ln_g"][0])
    aux = aux.at[EMB_B, :HIDDEN].set(params["emb_ln_b"][0])
    aux = aux.at[LN1_G, :HIDDEN].set(params["attn_ln_g"][0])
    aux = aux.at[LN1_B, :HIDDEN].set(params["attn_ln_b"][0])
    aux = aux.at[LN2_G, :HIDDEN].set(params["ffn_ln_g"][0])
    aux = aux.at[LN2_B, :HIDDEN].set(params["ffn_ln_b"][0])
    aux = aux.at[B_O, :HIDDEN].set(params["bo"][0])
    aux = aux.at[B_I, :INTERMEDIATE].set(params["bi"][0])
    aux = aux.at[B_F, :HIDDEN].set(params["bf"][0])
    aux = aux.at[POOL_B, :HIDDEN].set(params["pool_b"][0])
    aux = aux.at[CLS_B, :NUM_LABELS].set(params["cls_b"][0])
    for hh in range(NUM_HEADS):
        sl = slice(hh * HEAD_DIM, (hh + 1) * HEAD_DIM)
        aux = aux.at[BQ0 + hh, :HEAD_DIM].set(params["bq"][0, sl])
        aux = aux.at[BK0 + hh, :HEAD_DIM].set(params["bk"][0, sl])
        aux = aux.at[BV0 + hh, :HEAD_DIM].set(params["bv"][0, sl])
    # pos + (type-0) embeddings, precombined per token row (token_type_ids == 0)
    pos_type = jnp.tile(params["pos_emb"][:S], (B, 1)) + params["type_emb"][0][None, :]
    aux = aux.at[POS_OFF:POS_OFF + BS, :HIDDEN].set(pos_type)

    w = jnp.zeros((N_MATS, 128, 128), jnp.float32)
    w = w.at[W_EMB, :VOCAB, :HIDDEN].set(params["word_emb"])
    for hh in range(NUM_HEADS):
        sl = slice(hh * HEAD_DIM, (hh + 1) * HEAD_DIM)
        w = w.at[WQ0 + hh, :HIDDEN, :HEAD_DIM].set(params["wq"][:, sl])
        w = w.at[WK0 + hh, :HIDDEN, :HEAD_DIM].set(params["wk"][:, sl])
        w = w.at[WV0 + hh, :HIDDEN, :HEAD_DIM].set(params["wv"][:, sl])
        w = w.at[WO0 + hh, :HEAD_DIM, :HIDDEN].set(params["wo"][sl, :])
    w = w.at[W_I, :HIDDEN, :INTERMEDIATE].set(params["wi"])
    w = w.at[W_F, :INTERMEDIATE, :HIDDEN].set(params["wf"])
    w = w.at[W_POOL, :HIDDEN, :HIDDEN].set(params["pool_w"])
    w = w.at[W_CLS, :HIDDEN, :NUM_LABELS].set(params["cls_w"])

    return {"aux": aux, "wstack": w.astype(jnp.bfloat16)}


# ------------------------------ forward ---------------------------------------
def bert_classifier_forward(packed, input_ids, attention_mask):
    """Mirrors BertClassifier.forward: BERT -> pooler_output -> dropout -> linear."""
    B, S = input_ids.shape
    BS = B * S
    ids = input_ids.reshape(BS, 1).astype(jnp.int32)

    # additive attention mask over flattened tokens:
    # block-diagonal across the batch, -10000 on masked key positions.
    bid = jnp.arange(BS, dtype=jnp.int32) // S
    same_batch = bid[:, None] == bid[None, :]
    key_valid = attention_mask.reshape(1, BS) > 0
    amask = jnp.where(same_batch & key_valid, 0.0, -10000.0).astype(jnp.float32)

    out = pl.pallas_call(
        _make_fused_bert_kernel(B, S),
        out_shape=jax.ShapeDtypeStruct((OUT_ROWS, LPAD), jnp.float32),
    )(ids, amask, packed["aux"], packed["wstack"])
    return out[:B, :NUM_LABELS]


# -------------------------------- main -----------------------------------------
if __name__ == "__main__":
    key = jax.random.PRNGKey(0)
    k_param, k_ids = jax.random.split(key)

    params = init_params(k_param)
    packed = prepare_packed_params(params, BATCH, SEQ)

    input_ids = jax.random.randint(k_ids, (BATCH, SEQ), 0, VOCAB, dtype=jnp.int32)
    attention_mask = jnp.array([[1, 1, 1, 1, 1, 1, 0, 0],
                                [1, 1, 1, 1, 0, 0, 0, 0]], dtype=jnp.int32)

    logits = bert_classifier_forward(packed, input_ids, attention_mask)
    logits = jax.block_until_ready(logits)
    assert logits.shape == (BATCH, NUM_LABELS)
    assert bool(jnp.all(jnp.isfinite(logits)))
    print("KERNEL_OK")
</pallas_src>

<mosaic_0001>
module attributes {stable_mosaic.version = 11 : i64} {
  func.func @kernel(%arg0: memref<16x1xi32, #tpu.memory_space<vmem>>, %arg1: memref<16x16xf32, #tpu.memory_space<vmem>>, %arg2: memref<40x128xf32, #tpu.memory_space<vmem>>, %arg3: memref<13x128x128xbf16, #tpu.memory_space<vmem>>, %arg4: memref<8x128xf32, #tpu.memory_space<vmem>>) attributes {dimension_semantics = [], scalar_prefetch = 0 : i64, scratch_operands = 0 : i64, tpu.core_type = #tpu.core_type<tc>} {
    %0 = tpu.iota {dimensions = array<i32: 1>} : vector<1x128xi32>
    %c32_i32 = arith.constant 32 : i32
    %1 = vector.broadcast %c32_i32 : i32 to vector<1x128xi32>
    %2 = arith.cmpi slt, %0, %1 : vector<1x128xi32>
    %3 = arith.extui %2 : vector<1x128xi1> to vector<1x128xi32>
    %4 = arith.sitofp %3 : vector<1x128xi32> to vector<1x128xf32>
    %c0 = arith.constant 0 : index
    %c0_0 = arith.constant 0 : index
    %5 = vector.load %arg0[%c0, %c0_0] : memref<16x1xi32, #tpu.memory_space<vmem>>, vector<16x1xi32>
    %6 = tpu.iota {dimensions = array<i32: 1>} : vector<16x128xi32>
    %7 = vector.broadcast %5 : vector<16x1xi32> to vector<16x128xi32>
    %8 = arith.cmpi eq, %7, %6 : vector<16x128xi32>
    %9 = arith.extui %8 : vector<16x128xi1> to vector<16x128xi32>
    %10 = arith.sitofp %9 : vector<16x128xi32> to vector<16x128xf32>
    %11 = arith.truncf %10 : vector<16x128xf32> to vector<16x128xbf16>
    %c0_1 = arith.constant 0 : index
    %c0_2 = arith.constant 0 : index
    %c0_3 = arith.constant 0 : index
    %12 = vector.load %arg3[%c0_1, %c0_2, %c0_3] : memref<13x128x128xbf16, #tpu.memory_space<vmem>>, vector<1x128x128xbf16>
    %13 = vector.shape_cast %12 : vector<1x128x128xbf16> to vector<128x128xbf16>
    %cst = arith.constant dense<0.000000e+00> : vector<16x128xf32>
    %14 = tpu.matmul %11, %13, %cst {dimension_numbers = #tpu.dot_dimension_numbers<[1], [0], [0], [1], [0, 0, 1, 1], [], []>} : vector<16x128xbf16>, vector<128x128xbf16>, vector<16x128xf32> -> vector<16x128xf32>
    %c24 = arith.constant 24 : index
    %c0_4 = arith.constant 0 : index
    %15 = vector.load %arg2[%c24, %c0_4] : memref<40x128xf32, #tpu.memory_space<vmem>>, vector<16x128xf32>
    %16 = arith.addf %14, %15 : vector<16x128xf32>
    %cst_5 = arith.constant dense<0.000000e+00> : vector<16xf32>
    %17 = vector.multi_reduction <add>, %16, %cst_5 [1] : vector<16x128xf32> to vector<16xf32>
    %18 = vector.shape_cast %17 : vector<16xf32> to vector<16x1xf32>
    %cst_6 = arith.constant 3.125000e-02 : f32
    %19 = vector.broadcast %cst_6 : f32 to vector<16x1xf32>
    %20 = arith.mulf %18, %19 : vector<16x1xf32>
    %21 = vector.broadcast %20 : vector<16x1xf32> to vector<16x128xf32>
    %22 = arith.subf %16, %21 : vector<16x128xf32>
    %23 = vector.broadcast %4 : vector<1x128xf32> to vector<16x128xf32>
    %24 = arith.mulf %22, %23 : vector<16x128xf32>
    %25 = arith.mulf %24, %24 : vector<16x128xf32>
    %cst_7 = arith.constant dense<0.000000e+00> : vector<16xf32>
    %26 = vector.multi_reduction <add>, %25, %cst_7 [1] : vector<16x128xf32> to vector<16xf32>
    %27 = vector.shape_cast %26 : vector<16xf32> to vector<16x1xf32>
    %cst_8 = arith.constant 3.125000e-02 : f32
    %28 = vector.broadcast %cst_8 : f32 to vector<16x1xf32>
    %29 = arith.mulf %27, %28 : vector<16x1xf32>
    %cst_9 = arith.constant 9.99999996E-13 : f32
    %30 = vector.broadcast %cst_9 : f32 to vector<16x1xf32>
    %31 = arith.addf %29, %30 : vector<16x1xf32>
    %32 = math.rsqrt %31 : vector<16x1xf32>
    %33 = vector.broadcast %32 : vector<16x1xf32> to vector<16x128xf32>
    %34 = arith.mulf %24, %33 : vector<16x128xf32>
    %c0_10 = arith.constant 0 : index
    %c0_11 = arith.constant 0 : index
    %35 = vector.load %arg2[%c0_10, %c0_11] : memref<40x128xf32, #tpu.memory_space<vmem>>, vector<1x128xf32>
    %36 = vector.broadcast %35 : vector<1x128xf32> to vector<16x128xf32>
    %37 = arith.mulf %34, %36 : vector<16x128xf32>
    %c1 = arith.constant 1 : index
    %c0_12 = arith.constant 0 : index
    %38 = vector.load %arg2[%c1, %c0_12] : memref<40x128xf32, #tpu.memory_space<vmem>>, vector<1x128xf32>
    %39 = vector.broadcast %38 : vector<1x128xf32> to vector<16x128xf32>
    %40 = arith.addf %37, %39 : vector<16x128xf32>
    %c0_13 = arith.constant 0 : index
    %c0_14 = arith.constant 0 : index
    %41 = vector.load %arg1[%c0_13, %c0_14] : memref<16x16xf32, #tpu.memory_space<vmem>>, vector<16x16xf32>
    %42 = arith.truncf %40 : vector<16x128xf32> to vector<16x128xbf16>
    %cst_15 = arith.constant 0.000000e+00 : f32
    %43 = vector.broadcast %cst_15 : f32 to vector<16x128xf32>
    %c1_16 = arith.constant 1 : index
    %c0_17 = arith.constant 0 : index
    %c0_18 = arith.constant 0 : index
    %44 = vector.load %arg3[%c1_16, %c0_17, %c0_18] : memref<13x128x128xbf16, #tpu.memory_space<vmem>>, vector<1x128x128xbf16>
    %45 = vector.shape_cast %44 : vector<1x128x128xbf16> to vector<128x128xbf16>
    %cst_19 = arith.constant dense<0.000000e+00> : vector<16x128xf32>
    %46 = tpu.matmul %42, %45, %cst_19 {dimension_numbers = #tpu.dot_dimension_numbers<[1], [0], [0], [1], [0, 0, 1, 1], [], []>} : vector<16x128xbf16>, vector<128x128xbf16>, vector<16x128xf32> -> vector<16x128xf32>
    %c11 = arith.constant 11 : index
    %c0_20 = arith.constant 0 : index
    %47 = vector.load %arg2[%c11, %c0_20] : memref<40x128xf32, #tpu.memory_space<vmem>>, vector<1x128xf32>
    %48 = vector.broadcast %47 : vector<1x128xf32> to vector<16x128xf32>
    %49 = arith.addf %46, %48 : vector<16x128xf32>
    %c3 = arith.constant 3 : index
    %c0_21 = arith.constant 0 : index
    %c0_22 = arith.constant 0 : index
    %50 = vector.load %arg3[%c3, %c0_21, %c0_22] : memref<13x128x128xbf16, #tpu.memory_space<vmem>>, vector<1x128x128xbf16>
    %51 = vector.shape_cast %50 : vector<1x128x128xbf16> to vector<128x128xbf16>
    %cst_23 = arith.constant dense<0.000000e+00> : vector<16x128xf32>
    %52 = tpu.matmul %42, %51, %cst_23 {dimension_numbers = #tpu.dot_dimension_numbers<[1], [0], [0], [1], [0, 0, 1, 1], [], []>} : vector<16x128xbf16>, vector<128x128xbf16>, vector<16x128xf32> -> vector<16x128xf32>
    %c13 = arith.constant 13 : index
    %c0_24 = arith.constant 0 : index
    %53 = vector.load %arg2[%c13, %c0_24] : memref<40x128xf32, #tpu.memory_space<vmem>>, vector<1x128xf32>
    %54 = vector.broadcast %53 : vector<1x128xf32> to vector<16x128xf32>
    %55 = arith.addf %52, %54 : vector<16x128xf32>
    %c5 = arith.constant 5 : index
    %c0_25 = arith.constant 0 : index
    %c0_26 = arith.constant 0 : index
    %56 = vector.load %arg3[%c5, %c0_25, %c0_26] : memref<13x128x128xbf16, #tpu.memory_space<vmem>>, vector<1x128x128xbf16>
    %57 = vector.shape_cast %56 : vector<1x128x128xbf16> to vector<128x128xbf16>
    %cst_27 = arith.constant dense<0.000000e+00> : vector<16x128xf32>
    %58 = tpu.matmul %42, %57, %cst_27 {dimension_numbers = #tpu.dot_dimension_numbers<[1], [0], [0], [1], [0, 0, 1, 1], [], []>} : vector<16x128xbf16>, vector<128x128xbf16>, vector<16x128xf32> -> vector<16x128xf32>
    %c15 = arith.constant 15 : index
    %c0_28 = arith.constant 0 : index
    %59 = vector.load %arg2[%c15, %c0_28] : memref<40x128xf32, #tpu.memory_space<vmem>>, vector<1x128xf32>
    %60 = vector.broadcast %59 : vector<1x128xf32> to vector<16x128xf32>
    %61 = arith.addf %58, %60 : vector<16x128xf32>
    %cst_29 = arith.constant dense<0.000000e+00> : vector<16x16xf32>
    %62 = tpu.matmul %49, %55, %cst_29 {dimension_numbers = #tpu.dot_dimension_numbers<[1], [1], [0], [0], [0, 0, 1, 0], [], []>} : vector<16x128xf32>, vector<16x128xf32>, vector<16x16xf32> -> vector<16x16xf32>
    %cst_30 = arith.constant 2.500000e-01 : f32
    %63 = vector.broadcast %cst_30 : f32 to vector<16x16xf32>
    %64 = arith.mulf %62, %63 : vector<16x16xf32>
    %65 = arith.addf %64, %41 : vector<16x16xf32>
    %cst_31 = arith.constant dense<0xFF800000> : vector<16xf32>
    %66 = vector.multi_reduction <maximumf>, %65, %cst_31 [1] : vector<16x16xf32> to vector<16xf32>
    %67 = vector.shape_cast %66 : vector<16xf32> to vector<16x1xf32>
    %68 = vector.broadcast %67 : vector<16x1xf32> to vector<16x16xf32>
    %69 = arith.subf %65, %68 : vector<16x16xf32>
    %70 = math.exp %69 : vector<16x16xf32>
    %cst_32 = arith.constant dense<0.000000e+00> : vector<16xf32>
    %71 = vector.multi_reduction <add>, %70, %cst_32 [1] : vector<16x16xf32> to vector<16xf32>
    %72 = vector.shape_cast %71 : vector<16xf32> to vector<16x1xf32>
    %73 = tpu.reciprocal %72 {approx = true} : vector<16x1xf32> -> vector<16x1xf32>
    %74 = vector.broadcast %73 : vector<16x1xf32> to vector<16x16xf32>
    %75 = arith.mulf %70, %74 : vector<16x16xf32>
    %cst_33 = arith.constant dense<0.000000e+00> : vector<16x128xf32>
    %76 = tpu.matmul %75, %61, %cst_33 {dimension_numbers = #tpu.dot_dimension_numbers<[1], [0], [0], [1], [0, 0, 1, 1], [], []>} : vector<16x16xf32>, vector<16x128xf32>, vector<16x128xf32> -> vector<16x128xf32>
    %77 = arith.truncf %76 : vector<16x128xf32> to vector<16x128xbf16>
    %c7 = arith.constant 7 : index
    %c0_34 = arith.constant 0 : index
    %c0_35 = arith.constant 0 : index
    %78 = vector.load %arg3[%c7, %c0_34, %c0_35] : memref<13x128x128xbf16, #tpu.memory_space<vmem>>, vector<1x128x128xbf16>
    %79 = vector.shape_cast %78 : vector<1x128x128xbf16> to vector<128x128xbf16>
    %cst_36 = arith.constant dense<0.000000e+00> : vector<16x128xf32>
    %80 = tpu.matmul %77, %79, %cst_36 {dimension_numbers = #tpu.dot_dimension_numbers<[1], [0], [0], [1], [0, 0, 1, 1], [], []>} : vector<16x128xbf16>, vector<128x128xbf16>, vector<16x128xf32> -> vector<16x128xf32>
    %81 = arith.addf %43, %80 : vector<16x128xf32>
    %c2 = arith.constant 2 : index
    %c0_37 = arith.constant 0 : index
    %c0_38 = arith.constant 0 : index
    %82 = vector.load %arg3[%c2, %c0_37, %c0_38] : memref<13x128x128xbf16, #tpu.memory_space<vmem>>, vector<1x128x128xbf16>
    %83 = vector.shape_cast %82 : vector<1x128x128xbf16> to vector<128x128xbf16>
    %cst_39 = arith.constant dense<0.000000e+00> : vector<16x128xf32>
    %84 = tpu.matmul %42, %83, %cst_39 {dimension_numbers = #tpu.dot_dimension_numbers<[1], [0], [0], [1], [0, 0, 1, 1], [], []>} : vector<16x128xbf16>, vector<128x128xbf16>, vector<16x128xf32> -> vector<16x128xf32>
    %c12 = arith.constant 12 : index
    %c0_40 = arith.constant 0 : index
    %85 = vector.load %arg2[%c12, %c0_40] : memref<40x128xf32, #tpu.memory_space<vmem>>, vector<1x128xf32>
    %86 = vector.broadcast %85 : vector<1x128xf32> to vector<16x128xf32>
    %87 = arith.addf %84, %86 : vector<16x128xf32>
    %c4 = arith.constant 4 : index
    %c0_41 = arith.constant 0 : index
    %c0_42 = arith.constant 0 : index
    %88 = vector.load %arg3[%c4, %c0_41, %c0_42] : memref<13x128x128xbf16, #tpu.memory_space<vmem>>, vector<1x128x128xbf16>
    %89 = vector.shape_cast %88 : vector<1x128x128xbf16> to vector<128x128xbf16>
    %cst_43 = arith.constant dense<0.000000e+00> : vector<16x128xf32>
    %90 = tpu.matmul %42, %89, %cst_43 {dimension_numbers = #tpu.dot_dimension_numbers<[1], [0], [0], [1], [0, 0, 1, 1], [], []>} : vector<16x128xbf16>, vector<128x128xbf16>, vector<16x128xf32> -> vector<16x128xf32>
    %c14 = arith.constant 14 : index
    %c0_44 = arith.constant 0 : index
    %91 = vector.load %arg2[%c14, %c0_44] : memref<40x128xf32, #tpu.memory_space<vmem>>, vector<1x128xf32>
    %92 = vector.broadcast %91 : vector<1x128xf32> to vector<16x128xf32>
    %93 = arith.addf %90, %92 : vector<16x128xf32>
    %c6 = arith.constant 6 : index
    %c0_45 = arith.constant 0 : index
    %c0_46 = arith.constant 0 : index
    %94 = vector.load %arg3[%c6, %c0_45, %c0_46] : memref<13x128x128xbf16, #tpu.memory_space<vmem>>, vector<1x128x128xbf16>
    %95 = vector.shape_cast %94 : vector<1x128x128xbf16> to vector<128x128xbf16>
    %cst_47 = arith.constant dense<0.000000e+00> : vector<16x128xf32>
    %96 = tpu.matmul %42, %95, %cst_47 {dimension_numbers = #tpu.dot_dimension_numbers<[1], [0], [0], [1], [0, 0, 1, 1], [], []>} : vector<16x128xbf16>, vector<128x128xbf16>, vector<16x128xf32> -> vector<16x128xf32>
    %c16 = arith.constant 16 : index
    %c0_48 = arith.constant 0 : index
    %97 = vector.load %arg2[%c16, %c0_48] : memref<40x128xf32, #tpu.memory_space<vmem>>, vector<1x128xf32>
    %98 = vector.broadcast %97 : vector<1x128xf32> to vector<16x128xf32>
    %99 = arith.addf %96, %98 : vector<16x128xf32>
    %cst_49 = arith.constant dense<0.000000e+00> : vector<16x16xf32>
    %100 = tpu.matmul %87, %93, %cst_49 {dimension_numbers = #tpu.dot_dimension_numbers<[1], [1], [0], [0], [0, 0, 1, 0], [], []>} : vector<16x128xf32>, vector<16x128xf32>, vector<16x16xf32> -> vector<16x16xf32>
    %cst_50 = arith.constant 2.500000e-01 : f32
    %101 = vector.broadcast %cst_50 : f32 to vector<16x16xf32>
    %102 = arith.mulf %100, %101 : vector<16x16xf32>
    %103 = arith.addf %102, %41 : vector<16x16xf32>
    %cst_51 = arith.constant dense<0xFF800000> : vector<16xf32>
    %104 = vector.multi_reduction <maximumf>, %103, %cst_51 [1] : vector<16x16xf32> to vector<16xf32>
    %105 = vector.shape_cast %104 : vector<16xf32> to vector<16x1xf32>
    %106 = vector.broadcast %105 : vector<16x1xf32> to vector<16x16xf32>
    %107 = arith.subf %103, %106 : vector<16x16xf32>
    %108 = math.exp %107 : vector<16x16xf32>
    %cst_52 = arith.constant dense<0.000000e+00> : vector<16xf32>
    %109 = vector.multi_reduction <add>, %108, %cst_52 [1] : vector<16x16xf32> to vector<16xf32>
    %110 = vector.shape_cast %109 : vector<16xf32> to vector<16x1xf32>
    %111 = tpu.reciprocal %110 {approx = true} : vector<16x1xf32> -> vector<16x1xf32>
    %112 = vector.broadcast %111 : vector<16x1xf32> to vector<16x16xf32>
    %113 = arith.mulf %108, %112 : vector<16x16xf32>
    %cst_53 = arith.constant dense<0.000000e+00> : vector<16x128xf32>
    %114 = tpu.matmul %113, %99, %cst_53 {dimension_numbers = #tpu.dot_dimension_numbers<[1], [0], [0], [1], [0, 0, 1, 1], [], []>} : vector<16x16xf32>, vector<16x128xf32>, vector<16x128xf32> -> vector<16x128xf32>
    %115 = arith.truncf %114 : vector<16x128xf32> to vector<16x128xbf16>
    %c8 = arith.constant 8 : index
    %c0_54 = arith.constant 0 : index
    %c0_55 = arith.constant 0 : index
    %116 = vector.load %arg3[%c8, %c0_54, %c0_55] : memref<13x128x128xbf16, #tpu.memory_space<vmem>>, vector<1x128x128xbf16>
    %117 = vector.shape_cast %116 : vector<1x128x128xbf16> to vector<128x128xbf16>
    %cst_56 = arith.constant dense<0.000000e+00> : vector<16x128xf32>
    %118 = tpu.matmul %115, %117, %cst_56 {dimension_numbers = #tpu.dot_dimension_numbers<[1], [0], [0], [1], [0, 0, 1, 1], [], []>} : vector<16x128xbf16>, vector<128x128xbf16>, vector<16x128xf32> -> vector<16x128xf32>
    %119 = arith.addf %81, %118 : vector<16x128xf32>
    %c6_57 = arith.constant 6 : index
    %c0_58 = arith.constant 0 : index
    %120 = vector.load %arg2[%c6_57, %c0_58] : memref<40x128xf32, #tpu.memory_space<vmem>>, vector<1x128xf32>
    %121 = vector.broadcast %120 : vector<1x128xf32> to vector<16x128xf32>
    %122 = arith.addf %119, %121 : vector<16x128xf32>
    %123 = arith.addf %40, %122 : vector<16x128xf32>
    %cst_59 = arith.constant dense<0.000000e+00> : vector<16xf32>
    %124 = vector.multi_reduction <add>, %123, %cst_59 [1] : vector<16x128xf32> to vector<16xf32>
    %125 = vector.shape_cast %124 : vector<16xf32> to vector<16x1xf32>
    %cst_60 = arith.constant 3.125000e-02 : f32
    %126 = vector.broadcast %cst_60 : f32 to vector<16x1xf32>
    %127 = arith.mulf %125, %126 : vector<16x1xf32>
    %128 = vector.broadcast %127 : vector<16x1xf32> to vector<16x128xf32>
    %129 = arith.subf %123, %128 : vector<16x128xf32>
    %130 = vector.broadcast %4 : vector<1x128xf32> to vector<16x128xf32>
    %131 = arith.mulf %129, %130 : vector<16x128xf32>
    %132 = arith.mulf %131, %131 : vector<16x128xf32>
    %cst_61 = arith.constant dense<0.000000e+00> : vector<16xf32>
    %133 = vector.multi_reduction <add>, %132, %cst_61 [1] : vector<16x128xf32> to vector<16xf32>
    %134 = vector.shape_cast %133 : vector<16xf32> to vector<16x1xf32>
    %cst_62 = arith.constant 3.125000e-02 : f32
    %135 = vector.broadcast %cst_62 : f32 to vector<16x1xf32>
    %136 = arith.mulf %134, %135 : vector<16x1xf32>
    %cst_63 = arith.constant 9.99999996E-13 : f32
    %137 = vector.broadcast %cst_63 : f32 to vector<16x1xf32>
    %138 = arith.addf %136, %137 : vector<16x1xf32>
    %139 = math.rsqrt %138 : vector<16x1xf32>
    %140 = vector.broadcast %139 : vector<16x1xf32> to vector<16x128xf32>
    %141 = arith.mulf %131, %140 : vector<16x128xf32>
    %c2_64 = arith.constant 2 : index
    %c0_65 = arith.constant 0 : index
    %142 = vector.load %arg2[%c2_64, %c0_65] : memref<40x128xf32, #tpu.memory_space<vmem>>, vector<1x128xf32>
    %143 = vector.broadcast %142 : vector<1x128xf32> to vector<16x128xf32>
    %144 = arith.mulf %141, %143 : vector<16x128xf32>
    %c3_66 = arith.constant 3 : index
    %c0_67 = arith.constant 0 : index
    %145 = vector.load %arg2[%c3_66, %c0_67] : memref<40x128xf32, #tpu.memory_space<vmem>>, vector<1x128xf32>
    %146 = vector.broadcast %145 : vector<1x128xf32> to vector<16x128xf32>
    %147 = arith.addf %144, %146 : vector<16x128xf32>
    %148 = arith.truncf %147 : vector<16x128xf32> to vector<16x128xbf16>
    %c9 = arith.constant 9 : index
    %c0_68 = arith.constant 0 : index
    %c0_69 = arith.constant 0 : index
    %149 = vector.load %arg3[%c9, %c0_68, %c0_69] : memref<13x128x128xbf16, #tpu.memory_space<vmem>>, vector<1x128x128xbf16>
    %150 = vector.shape_cast %149 : vector<1x128x128xbf16> to vector<128x128xbf16>
    %cst_70 = arith.constant dense<0.000000e+00> : vector<16x128xf32>
    %151 = tpu.matmul %148, %150, %cst_70 {dimension_numbers = #tpu.dot_dimension_numbers<[1], [0], [0], [1], [0, 0, 1, 1], [], []>} : vector<16x128xbf16>, vector<128x128xbf16>, vector<16x128xf32> -> vector<16x128xf32>
    %c7_71 = arith.constant 7 : index
    %c0_72 = arith.constant 0 : index
    %152 = vector.load %arg2[%c7_71, %c0_72] : memref<40x128xf32, #tpu.memory_space<vmem>>, vector<1x128xf32>
    %153 = vector.broadcast %152 : vector<1x128xf32> to vector<16x128xf32>
    %154 = arith.addf %151, %153 : vector<16x128xf32>
    %cst_73 = arith.constant 5.000000e-01 : f32
    %155 = vector.broadcast %cst_73 : f32 to vector<16x128xf32>
    %156 = arith.mulf %155, %154 : vector<16x128xf32>
    %cst_74 = arith.constant 4.471500e-02 : f32
    %157 = vector.broadcast %cst_74 : f32 to vector<16x128xf32>
    %158 = arith.mulf %157, %154 : vector<16x128xf32>
    %159 = arith.mulf %158, %154 : vector<16x128xf32>
    %160 = arith.mulf %159, %154 : vector<16x128xf32>
    %161 = arith.addf %154, %160 : vector<16x128xf32>
    %cst_75 = arith.constant 0.797884583 : f32
    %162 = vector.broadcast %cst_75 : f32 to vector<16x128xf32>
    %163 = arith.mulf %162, %161 : vector<16x128xf32>
    %164 = math.tanh %163 : vector<16x128xf32>
    %cst_76 = arith.constant 1.000000e+00 : f32
    %165 = vector.broadcast %cst_76 : f32 to vector<16x128xf32>
    %166 = arith.addf %165, %164 : vector<16x128xf32>
    %167 = arith.mulf %156, %166 : vector<16x128xf32>
    %168 = arith.truncf %167 : vector<16x128xf32> to vector<16x128xbf16>
    %c10 = arith.constant 10 : index
    %c0_77 = arith.constant 0 : index
    %c0_78 = arith.constant 0 : index
    %169 = vector.load %arg3[%c10, %c0_77, %c0_78] : memref<13x128x128xbf16, #tpu.memory_space<vmem>>, vector<1x128x128xbf16>
    %170 = vector.shape_cast %169 : vector<1x128x128xbf16> to vector<128x128xbf16>
    %cst_79 = arith.constant dense<0.000000e+00> : vector<16x128xf32>
    %171 = tpu.matmul %168, %170, %cst_79 {dimension_numbers = #tpu.dot_dimension_numbers<[1], [0], [0], [1], [0, 0, 1, 1], [], []>} : vector<16x128xbf16>, vector<128x128xbf16>, vector<16x128xf32> -> vector<16x128xf32>
    %c8_80 = arith.constant 8 : index
    %c0_81 = arith.constant 0 : index
    %172 = vector.load %arg2[%c8_80, %c0_81] : memref<40x128xf32, #tpu.memory_space<vmem>>, vector<1x128xf32>
    %173 = vector.broadcast %172 : vector<1x128xf32> to vector<16x128xf32>
    %174 = arith.addf %171, %173 : vector<16x128xf32>
    %175 = arith.addf %147, %174 : vector<16x128xf32>
    %cst_82 = arith.constant dense<0.000000e+00> : vector<16xf32>
    %176 = vector.multi_reduction <add>, %175, %cst_82 [1] : vector<16x128xf32> to vector<16xf32>
    %177 = vector.shape_cast %176 : vector<16xf32> to vector<16x1xf32>
    %cst_83 = arith.constant 3.125000e-02 : f32
    %178 = vector.broadcast %cst_83 : f32 to vector<16x1xf32>
    %179 = arith.mulf %177, %178 : vector<16x1xf32>
    %180 = vector.broadcast %179 : vector<16x1xf32> to vector<16x128xf32>
    %181 = arith.subf %175, %180 : vector<16x128xf32>
    %182 = vector.broadcast %4 : vector<1x128xf32> to vector<16x128xf32>
    %183 = arith.mulf %181, %182 : vector<16x128xf32>
    %184 = arith.mulf %183, %183 : vector<16x128xf32>
    %cst_84 = arith.constant dense<0.000000e+00> : vector<16xf32>
    %185 = vector.multi_reduction <add>, %184, %cst_84 [1] : vector<16x128xf32> to vector<16xf32>
    %186 = vector.shape_cast %185 : vector<16xf32> to vector<16x1xf32>
    %cst_85 = arith.constant 3.125000e-02 : f32
    %187 = vector.broadcast %cst_85 : f32 to vector<16x1xf32>
    %188 = arith.mulf %186, %187 : vector<16x1xf32>
    %cst_86 = arith.constant 9.99999996E-13 : f32
    %189 = vector.broadcast %cst_86 : f32 to vector<16x1xf32>
    %190 = arith.addf %188, %189 : vector<16x1xf32>
    %191 = math.rsqrt %190 : vector<16x1xf32>
    %192 = vector.broadcast %191 : vector<16x1xf32> to vector<16x128xf32>
    %193 = arith.mulf %183, %192 : vector<16x128xf32>
    %c4_87 = arith.constant 4 : index
    %c0_88 = arith.constant 0 : index
    %194 = vector.load %arg2[%c4_87, %c0_88] : memref<40x128xf32, #tpu.memory_space<vmem>>, vector<1x128xf32>
    %195 = vector.broadcast %194 : vector<1x128xf32> to vector<16x128xf32>
    %196 = arith.mulf %193, %195 : vector<16x128xf32>
    %c5_89 = arith.constant 5 : index
    %c0_90 = arith.constant 0 : index
    %197 = vector.load %arg2[%c5_89, %c0_90] : memref<40x128xf32, #tpu.memory_space<vmem>>, vector<1x128xf32>
    %198 = vector.broadcast %197 : vector<1x128xf32> to vector<16x128xf32>
    %199 = arith.addf %196, %198 : vector<16x128xf32>
    %200 = tpu.iota {dimensions = array<i32: 0>} : vector<8x16xi32>
    %201 = tpu.iota {dimensions = array<i32: 1>} : vector<8x16xi32>
    %c8_i32 = arith.constant 8 : i32
    %202 = vector.broadcast %c8_i32 : i32 to vector<8x16xi32>
    %203 = arith.muli %200, %202 : vector<8x16xi32>
    %204 = arith.cmpi eq, %201, %203 : vector<8x16xi32>
    %c2_i32 = arith.constant 2 : i32
    %205 = vector.broadcast %c2_i32 : i32 to vector<8x16xi32>
    %206 = arith.cmpi slt, %200, %205 : vector<8x16xi32>
    %207 = arith.andi %204, %206 : vector<8x16xi1>
    %208 = arith.extui %207 : vector<8x16xi1> to vector<8x16xi32>
    %209 = arith.sitofp %208 : vector<8x16xi32> to vector<8x16xf32>
    %210 = arith.truncf %209 : vector<8x16xf32> to vector<8x16xbf16>
    %211 = arith.truncf %199 : vector<16x128xf32> to vector<16x128xbf16>
    %cst_91 = arith.constant dense<0.000000e+00> : vector<8x128xf32>
    %212 = tpu.matmul %210, %211, %cst_91 {dimension_numbers = #tpu.dot_dimension_numbers<[1], [0], [0], [1], [0, 0, 1, 1], [], []>} : vector<8x16xbf16>, vector<16x128xbf16>, vector<8x128xf32> -> vector<8x128xf32>
    %213 = arith.truncf %212 : vector<8x128xf32> to vector<8x128xbf16>
    %c11_92 = arith.constant 11 : index
    %c0_93 = arith.constant 0 : index
    %c0_94 = arith.constant 0 : index
    %214 = vector.load %arg3[%c11_92, %c0_93, %c0_94] : memref<13x128x128xbf16, #tpu.memory_space<vmem>>, vector<1x128x128xbf16>
    %215 = vector.shape_cast %214 : vector<1x128x128xbf16> to vector<128x128xbf16>
    %cst_95 = arith.constant dense<0.000000e+00> : vector<8x128xf32>
    %216 = tpu.matmul %213, %215, %cst_95 {dimension_numbers = #tpu.dot_dimension_numbers<[1], [0], [0], [1], [0, 0, 1, 1], [], []>} : vector<8x128xbf16>, vector<128x128xbf16>, vector<8x128xf32> -> vector<8x128xf32>
    %c9_96 = arith.constant 9 : index
    %c0_97 = arith.constant 0 : index
    %217 = vector.load %arg2[%c9_96, %c0_97] : memref<40x128xf32, #tpu.memory_space<vmem>>, vector<1x128xf32>
    %218 = vector.broadcast %217 : vector<1x128xf32> to vector<8x128xf32>
    %219 = arith.addf %216, %218 : vector<8x128xf32>
    %220 = math.tanh %219 : vector<8x128xf32>
    %221 = arith.truncf %220 : vector<8x128xf32> to vector<8x128xbf16>
    %c12_98 = arith.constant 12 : index
    %c0_99 = arith.constant 0 : index
    %c0_100 = arith.constant 0 : index
    %222 = vector.load %arg3[%c12_98, %c0_99, %c0_100] : memref<13x128x128xbf16, #tpu.memory_space<vmem>>, vector<1x128x128xbf16>
    %223 = vector.shape_cast %222 : vector<1x128x128xbf16> to vector<128x128xbf16>
    %cst_101 = arith.constant dense<0.000000e+00> : vector<8x128xf32>
    %224 = tpu.matmul %221, %223, %cst_101 {dimension_numbers = #tpu.dot_dimension_numbers<[1], [0], [0], [1], [0, 0, 1, 1], [], []>} : vector<8x128xbf16>, vector<128x128xbf16>, vector<8x128xf32> -> vector<8x128xf32>
    %c10_102 = arith.constant 10 : index
    %c0_103 = arith.constant 0 : index
    %225 = vector.load %arg2[%c10_102, %c0_103] : memref<40x128xf32, #tpu.memory_space<vmem>>, vector<1x128xf32>
    %226 = vector.broadcast %225 : vector<1x128xf32> to vector<8x128xf32>
    %227 = arith.addf %224, %226 : vector<8x128xf32>
    %c0_104 = arith.constant 0 : index
    %c0_105 = arith.constant 0 : index
    %228 = vector.load %arg4[%c0_104, %c0_105] : memref<8x128xf32, #tpu.memory_space<vmem>>, vector<8x128xf32>
    tpu.vector_store %arg4[%c0_104, %c0_105], %227 {strides = array<i32>} : memref<8x128xf32, #tpu.memory_space<vmem>>, vector<8x128xf32>,
    return
  }
}

</mosaic_0001>

<llo_original>
// kernel: tpu_custom_call.1
$region0: #{tpu_custom_call.1}
  #allocation0 [shape = 'u32[]', space=smem, size = 0x4, offset = 0x4, fixed_abs, tag = 'smem constant byte address 0x4 - core index']
  #allocation1 [shape = 'u32[144,128]{1,0:T(1,128)}', space=vmem, size = 0x12000, scoped, tag = 'internal scratch']
  %s0 = inlined_call_operand.vmem [shape: s32[16,1], index: 0, kind: input, shape index: {}]
  %s1 = inlined_call_operand.vmem [shape: f32[16,16], index: 1, kind: input, shape index: {}]
  %s2 = inlined_call_operand.hbm [shape: f32[40,128], index: 2, kind: input, shape index: {}]
  %s3 = inlined_call_operand.hbm [shape: bf16[13,128,128], index: 3, kind: input, shape index: {}]
  %s4 = inlined_call_operand.hbm [shape: f32[8,128], index: 4, kind: output, shape index: {}]
  %s5 = sld [smem:[#allocation0]]
  $region34: #{tpu_custom_call.1} parent=0
    _
  %s7 = ssub.s32 1, %s5
  %s8 = scalar_select 0, %s7, %s5
  $region1: #{tpu_custom_call.1} parent=0
    #allocation2 [shape = 'u8[20480]{0}', space=vmem, size = 0x5000, scoped, tag = 'input window, operand 2, single buffered']
    #allocation3 [shape = 's32[1]{0}', space=sflag, size = 0x4, scoped, tag = 'scoped memory for tpu_custom_call.1']
    #allocation4 [shape = 's32[1]{0}', space=sflag, size = 0x4, scoped, tag = 'scoped memory for tpu_custom_call.1']
    #allocation5 [shape = 'u8[425984]{0}', space=vmem, size = 0x68000, scoped, tag = 'input window, operand 3, single buffered']
    #allocation6 [shape = 's32[1]{0}', space=sflag, size = 0x4, scoped, tag = 'scoped memory for tpu_custom_call.1']
    #allocation7 [shape = 'u8[4096]{0}', space=vmem, size = 0x1000, scoped, tag = 'output window, operand 0, single buffered']
    %9 = vsyncpa [#allocation3], 0
    %10 = vsyncpa [#allocation6], 0
    %11 = vsyncpa [#allocation4], 0
    // Predicated region
    $region2: #{tpu_custom_call.1} parent=1 // pred_check
      _
    $region3: #{tpu_custom_call.1} parent=1 // pred_check_branch
      %13 = sbr.rel (0) target = $region5
    $region4: #{tpu_custom_call.1} parent=1 // pred_region
      _
    $region5: #{tpu_custom_call.1} parent=1 // pred_fallthru
      _
    // Predicated region
    $region6: #{tpu_custom_call.1} parent=1 // pred_check
      _
    $region7: #{tpu_custom_call.1} parent=1 // pred_check_branch
      %15 = sbr.rel (0) target = $region9
    $region8: #{tpu_custom_call.1} parent=1 // pred_region
      _
    $region9: #{tpu_custom_call.1} parent=1 // pred_fallthru
      _
    // Predicated region
    $region10: #{tpu_custom_call.1} parent=1 // pred_check
      _
    $region11: #{tpu_custom_call.1} parent=1 // pred_check_branch
      %17 = sbr.rel (0) target = $region13
    $region12: #{tpu_custom_call.1} parent=1 // pred_region
      %s19 = ssub.s32 640, 640
      %20 = vsyncadd [#allocation3], %s19
      %s21 = sshll.u32 [#allocation2], 4
      %s22 = int_to_ptr.vmem [resolvable:$true] %s21
      %27 = dma.hbm_to_vmem [thread:$0]  %s2, 640, %s22, [#allocation3], 128, 128, 8
    $region13: #{tpu_custom_call.1} parent=1 // pred_fallthru
      _
    // Predicated region
    $region14: #{tpu_custom_call.1} parent=1 // pred_check
      _
    $region15: #{tpu_custom_call.1} parent=1 // pred_check_branch
      %29 = sbr.rel (0) target = $region17
    $region16: #{tpu_custom_call.1} parent=1 // pred_region
      %s31 = ssub.s32 13312, 13312
      %32 = vsyncadd [#allocation6], %s31
      %s33 = sshll.u32 [#allocation5], 4
      %s34 = int_to_ptr.vmem [resolvable:$true] %s33
      %39 = dma.hbm_to_vmem [thread:$0]  %s3, 13312, %s34, [#allocation6], 64, 64, 4
    $region17: #{tpu_custom_call.1} parent=1 // pred_fallthru
      _
    // Predicated region
    $region18: #{tpu_custom_call.1} parent=1 // pred_check
      _
    $region19: #{tpu_custom_call.1} parent=1 // pred_check_branch
      %41 = sbr.rel (0) target = $region21
    $region20: #{tpu_custom_call.1} parent=1 // pred_region
      %42 = dma.done [#allocation3], 640
    $region21: #{tpu_custom_call.1} parent=1 // pred_fallthru
      _
    // Predicated region
    $region22: #{tpu_custom_call.1} parent=1 // pred_check
      _
    $region23: #{tpu_custom_call.1} parent=1 // pred_check_branch
      %44 = sbr.rel (0) target = $region25
    $region24: #{tpu_custom_call.1} parent=1 // pred_region
      %45 = dma.done [#allocation6], 13312
    $region25: #{tpu_custom_call.1} parent=1 // pred_fallthru
      _
    %v47 = vlaneseq
    %v48 = vand.u32 %v47, 127
    %vm49 = vcmp.lt.s32.totalorder %v48, 32
    %v50 = vsel %vm49, 1, 0
    %v51 = vcvt.s32.f32 %v50
    %v52 = vld [vmem:[%s0] sm:$0xff]
    %v53 = vld [vmem:[%s0 + $0x8] sm:$0xff]
    %54 = vset.pattern.permute.xlu0 0
    %55 = vperm.xlu0 %54, %v52
    %v56 = vpop.permute.xlu0 %55
    %57 = vset.pattern.permute.xlu0 0
    %58 = vperm.xlu0 %57, %v53
    %v59 = vpop.permute.xlu0 %58
    %vm60 = vcmp.eq.s32.totalorder %v56, %v48
    %vm61 = vcmp.eq.s32.totalorder %v59, %v48
    %v62 = vsel %vm60, 1, 0
    %v63 = vsel %vm61, 1, 0
    %v64 = vcvt.s32.f32 %v62
    %v65 = vcvt.s32.f32 %v63
    %v66 = vpack.c.bf16 %v65, %v64
    %v67 = vld [vmem:[#allocation5] sm:$0xf]
    %v68 = vld [vmem:[#allocation5 + $0x4] sm:$0xf]
    %v69 = vld [vmem:[#allocation5 + $0x8] sm:$0xf]
    %v70 = vld [vmem:[#allocation5 + $0xc] sm:$0xf]
    %v71 = vld [vmem:[#allocation5 + $0x10] sm:$0xf]
    %v72 = vld [vmem:[#allocation5 + $0x14] sm:$0xf]
    %v73 = vld [vmem:[#allocation5 + $0x18] sm:$0xf]
    %v74 = vld [vmem:[#allocation5 + $0x1c] sm:$0xf]
    %v75 = vld [vmem:[#allocation5 + $0x20] sm:$0xf]
    %v76 = vld [vmem:[#allocation5 + $0x24] sm:$0xf]
    %v77 = vld [vmem:[#allocation5 + $0x28] sm:$0xf]
    %v78 = vld [vmem:[#allocation5 + $0x2c] sm:$0xf]
    %v79 = vld [vmem:[#allocation5 + $0x30] sm:$0xf]
    %v80 = vld [vmem:[#allocation5 + $0x34] sm:$0xf]
    %v81 = vld [vmem:[#allocation5 + $0x38] sm:$0xf]
    %v82 = vld [vmem:[#allocation5 + $0x3c] sm:$0xf]
    %v83 = vld [vmem:[#allocation2 + $0x18] sm:$0xff]
    %v84 = vld [vmem:[#allocation2 + $0x20] sm:$0xff]
    %v101 = vunpack.c.l.b16 %v67
    %v102 = vunpack.c.l.b16 %v68
    %v103 = vunpack.c.l.b16 %v69
    %v104 = vunpack.c.l.b16 %v70
    %v105 = vunpack.c.l.b16 %v71
    %v106 = vunpack.c.l.b16 %v72
    %v107 = vunpack.c.l.b16 %v73
    %v108 = vunpack.c.l.b16 %v74
    %v109 = vunpack.c.l.b16 %v75
    %v110 = vunpack.c.l.b16 %v76
    %v111 = vunpack.c.l.b16 %v77
    %v112 = vunpack.c.l.b16 %v78
    %v113 = vunpack.c.l.b16 %v79
    %v114 = vunpack.c.l.b16 %v80
    %v115 = vunpack.c.l.b16 %v81
    %v116 = vunpack.c.l.b16 %v82
    %v117 = vpack.c.b16 %v102, %v101
    %v118 = vpack.c.b16 %v104, %v103
    %v119 = vpack.c.b16 %v106, %v105
    %v120 = vpack.c.b16 %v108, %v107
    %v121 = vpack.c.b16 %v110, %v109
    %v122 = vpack.c.b16 %v112, %v111
    %v123 = vpack.c.b16 %v114, %v113
    %v124 = vpack.c.b16 %v116, %v115
    %133 = vmatprep.subr.bf16.mxu0 0
    %134 = vmatpush1.bf16.msra.mxu0 %v124
    %135 = vmatprep.subr.bf16.mxu0 0
    %136 = vmatpush1.bf16.msra.mxu0 %v123
    %137 = vmatprep.subr.bf16.mxu0 0
    %138 = vmatpush1.bf16.msra.mxu0 %v122
    %139 = vmatprep.subr.bf16.mxu0 0
    %140 = vmatpush1.bf16.msra.mxu0 %v121
    %141 = vmatprep.subr.bf16.mxu0 0
    %142 = vmatpush1.bf16.msra.mxu0 %v120
    %143 = vmatprep.subr.bf16.mxu0 0
    %144 = vmatpush1.bf16.msra.mxu0 %v119
    %145 = vmatprep.subr.bf16.mxu0 0
    %146 = vmatpush1.bf16.msra.mxu0 %v118
    %147 = vmatprep.subr.bf16.mxu0 0
    %148 = vmatpush1.bf16.msra.mxu0 %v117
    %149 = vmatprep.subr.bf16.mxu0 0
    %150 = vmatpush2.bf16.msra.mxu0 0
    %151 = vmatprep.subr.bf16.mxu0 0
    %152 = vmatpush2.bf16.msra.mxu0 0
    %153 = vmatprep.subr.bf16.mxu0 0
    %154 = vmatpush2.bf16.msra.mxu0 0
    %155 = vmatprep.subr.bf16.mxu0 0
    %156 = vmatpush2.bf16.msra.mxu0 0
    %157 = vmatprep.subr.bf16.mxu0 0
    %158 = vmatpush2.bf16.msra.mxu0 0
    %159 = vmatprep.subr.bf16.mxu0 0
    %160 = vmatpush2.bf16.msra.mxu0 0
    %161 = vmatprep.subr.bf16.mxu0 0
    %162 = vmatpush2.bf16.msra.mxu0 0
    %163 = vmatprep.subr.bf16.mxu0 0
    %164 = vmatpush2.bf16.msra.mxu0 0
    %165 = vmatprep.mubr.bf16.mxu0 0
    %166 = vmatmul.mubr.bf16.gmra.mxu0 %v66
    %v167 = vpop.f32.mrf.mxu0
    %v168 = vadd.f32 %v83, %v167
    %v169 = vpop.f32.mrf.mxu0
    %v170 = vpop.f32.mrf.mxu0
    %v171 = vadd.f32 %v84, %v170
    %v172 = vpop.f32.mrf.mxu0
    %173 = vdwg.mxu0
    %174 = vadd.xlane.f32.xlu0 %v168
    %v175 = vpop.xlane.xlu0 %174
    %176 = vadd.xlane.f32.xlu0 %v171
    %v177 = vpop.xlane.xlu0 %176
    %v178 = vmul.f32 %v175, 0.03125
    %v179 = vmul.f32 %v177, 0.03125
    %v180 = vsub.f32 %v168, %v178
    %v181 = vsub.f32 %v171, %v179
    %v182 = vmul.f32 %v180, %v51
    %v183 = vmul.f32 %v181, %v51
    %v184 = vmul.f32 %v182, %v182
    %v185 = vmul.f32 %v183, %v183
    %186 = vadd.xlane.f32.xlu0 %v184
    %v187 = vpop.xlane.xlu0 %186
    %188 = vadd.xlane.f32.xlu0 %v185
    %v189 = vpop.xlane.xlu0 %188
    %v190 = vmul.f32 %v187, 0.03125
    %v191 = vmul.f32 %v189, 0.03125
    %v192 = vadd.f32 %v190, 1e-12
    %v193 = vadd.f32 %v191, 1e-12
    %v194 = vrsqrt.pop %v192
    %v195 = vrsqrt.pop %v193
    %v196 = vmul.f32 %v182, %v194
    %v197 = vmul.f32 %v183, %v195
    %v198 = vld [vmem:[#allocation2] sm:$0x1]
    %v199 = vlaneseq
    %v200 = vshrl.u32 %v199, 7
    %v201 = vsub.s32 0, %v200
    %v202 = vrot.slane %v198, %v201
    %v203 = vmul.f32 %v196, %v202
    %v204 = vmul.f32 %v197, %v202
    %v205 = vld [vmem:[#allocation2 + $0x1] sm:$0x1]
    %v206 = vlaneseq
    %v207 = vshrl.u32 %v206, 7
    %v208 = vsub.s32 0, %v207
    %v209 = vrot.slane %v205, %v208
    %v210 = vadd.f32 %v203, %v209
    %v211 = vadd.f32 %v204, %v209
    %v212 = vld [vmem:[%s1] sm:$0xff]
    %v213 = vld [vmem:[%s1 + $0x8] sm:$0xff]
    %v214 = vpack.c.bf16 %v211, %v210
    %s215 = scalar_lea.vmem [#allocation5], 64
    %v216 = vld [vmem:[%s215] sm:$0xf]
    %v217 = vld [vmem:[%s215 + $0x4] sm:$0xf]
    %v218 = vld [vmem:[%s215 + $0x8] sm:$0xf]
    %v219 = vld [vmem:[%s215 + $0xc] sm:$0xf]
    %v220 = vld [vmem:[%s215 + $0x10] sm:$0xf]
    %v221 = vld [vmem:[%s215 + $0x14] sm:$0xf]
    %v222 = vld [vmem:[%s215 + $0x18] sm:$0xf]
    %v223 = vld [vmem:[%s215 + $0x1c] sm:$0xf]
    %v224 = vld [vmem:[%s215 + $0x20] sm:$0xf]
    %v225 = vld [vmem:[%s215 + $0x24] sm:$0xf]
    %v226 = vld [vmem:[%s215 + $0x28] sm:$0xf]
    %v227 = vld [vmem:[%s215 + $0x2c] sm:$0xf]
    %v228 = vld [vmem:[%s215 + $0x30] sm:$0xf]
    %v229 = vld [vmem:[%s215 + $0x34] sm:$0xf]
    %v230 = vld [vmem:[%s215 + $0x38] sm:$0xf]
    %v231 = vld [vmem:[%s215 + $0x3c] sm:$0xf]
    %v232 = vld [vmem:[#allocation2 + $0xb] sm:$0x1]
    %v233 = vlaneseq
    %v234 = vshrl.u32 %v233, 7
    %v235 = vsub.s32 0, %v234
    %v236 = vrot.slane %v232, %v235
    %v253 = vunpack.c.l.b16 %v216
    %v254 = vunpack.c.l.b16 %v217
    %v255 = vunpack.c.l.b16 %v218
    %v256 = vunpack.c.l.b16 %v219
    %v257 = vunpack.c.l.b16 %v220
    %v258 = vunpack.c.l.b16 %v221
    %v259 = vunpack.c.l.b16 %v222
    %v260 = vunpack.c.l.b16 %v223
    %v261 = vunpack.c.l.b16 %v224
    %v262 = vunpack.c.l.b16 %v225
    %v263 = vunpack.c.l.b16 %v226
    %v264 = vunpack.c.l.b16 %v227
    %v265 = vunpack.c.l.b16 %v228
    %v266 = vunpack.c.l.b16 %v229
    %v267 = vunpack.c.l.b16 %v230
    %v268 = vunpack.c.l.b16 %v231
    %v269 = vpack.c.b16 %v254, %v253
    %v270 = vpack.c.b16 %v256, %v255
    %v271 = vpack.c.b16 %v258, %v257
    %v272 = vpack.c.b16 %v260, %v259
    %v273 = vpack.c.b16 %v262, %v261
    %v274 = vpack.c.b16 %v264, %v263
    %v275 = vpack.c.b16 %v266, %v265
    %v276 = vpack.c.b16 %v268, %v267
    %285 = vmatprep.subr.bf16.mxu0 0
    %286 = vmatpush1.bf16.msra.mxu0 %v276
    %287 = vmatprep.subr.bf16.mxu0 0
    %288 = vmatpush1.bf16.msra.mxu0 %v275
    %289 = vmatprep.subr.bf16.mxu0 0
    %290 = vmatpush1.bf16.msra.mxu0 %v274
    %291 = vmatprep.subr.bf16.mxu0 0
    %292 = vmatpush1.bf16.msra.mxu0 %v273
    %293 = vmatprep.subr.bf16.mxu0 0
    %294 = vmatpush1.bf16.msra.mxu0 %v272
    %295 = vmatprep.subr.bf16.mxu0 0
    %296 = vmatpush1.bf16.msra.mxu0 %v271
    %297 = vmatprep.subr.bf16.mxu0 0
    %298 = vmatpush1.bf16.msra.mxu0 %v270
    %299 = vmatprep.subr.bf16.mxu0 0
    %300 = vmatpush1.bf16.msra.mxu0 %v269
    %301 = vmatprep.subr.bf16.mxu0 0
    %302 = vmatpush2.bf16.msra.mxu0 0
    %303 = vmatprep.subr.bf16.mxu0 0
    %304 = vmatpush2.bf16.msra.mxu0 0
    %305 = vmatprep.subr.bf16.mxu0 0
    %306 = vmatpush2.bf16.msra.mxu0 0
    %307 = vmatprep.subr.bf16.mxu0 0
    %308 = vmatpush2.bf16.msra.mxu0 0
    %309 = vmatprep.subr.bf16.mxu0 0
    %310 = vmatpush2.bf16.msra.mxu0 0
    %311 = vmatprep.subr.bf16.mxu0 0
    %312 = vmatpush2.bf16.msra.mxu0 0
    %313 = vmatprep.subr.bf16.mxu0 0
    %314 = vmatpush2.bf16.msra.mxu0 0
    %315 = vmatprep.subr.bf16.mxu0 0
    %316 = vmatpush2.bf16.msra.mxu0 0
    %317 = vmatprep.mubr.bf16.mxu0 0
    %318 = vmatmul.mubr.bf16.gmra.mxu0 %v214
    %v319 = vpop.f32.mrf.mxu0
    %v320 = vadd.f32 %v236, %v319
    %v321 = vpop.f32.mrf.mxu0
    %v322 = vpop.f32.mrf.mxu0
    %v323 = vadd.f32 %v236, %v322
    %v324 = vpop.f32.mrf.mxu0
    %325 = vdwg.mxu0
    %s326 = scalar_lea.vmem [#allocation5], 192
    %v327 = vld [vmem:[%s326] sm:$0xf]
    %v328 = vld [vmem:[%s326 + $0x4] sm:$0xf]
    %v329 = vld [vmem:[%s326 + $0x8] sm:$0xf]
    %v330 = vld [vmem:[%s326 + $0xc] sm:$0xf]
    %v331 = vld [vmem:[%s326 + $0x10] sm:$0xf]
    %v332 = vld [vmem:[%s326 + $0x14] sm:$0xf]
    %v333 = vld [vmem:[%s326 + $0x18] sm:$0xf]
    %v334 = vld [vmem:[%s326 + $0x1c] sm:$0xf]
    %v335 = vld [vmem:[%s326 + $0x20] sm:$0xf]
    %v336 = vld [vmem:[%s326 + $0x24] sm:$0xf]
    %v337 = vld [vmem:[%s326 + $0x28] sm:$0xf]
    %v338 = vld [vmem:[%s326 + $0x2c] sm:$0xf]
    %v339 = vld [vmem:[%s326 + $0x30] sm:$0xf]
    %v340 = vld [vmem:[%s326 + $0x34] sm:$0xf]
    %v341 = vld [vmem:[%s326 + $0x38] sm:$0xf]
    %v342 = vld [vmem:[%s326 + $0x3c] sm:$0xf]
    %v343 = vld [vmem:[#allocation2 + $0xd] sm:$0x1]
    %v344 = vlaneseq
    %v345 = vshrl.u32 %v344, 7
    %v346 = vsub.s32 0, %v345
    %v347 = vrot.slane %v343, %v346
    %v364 = vunpack.c.l.b16 %v327
    %v365 = vunpack.c.l.b16 %v328
    %v366 = vunpack.c.l.b16 %v329
    %v367 = vunpack.c.l.b16 %v330
    %v368 = vunpack.c.l.b16 %v331
    %v369 = vunpack.c.l.b16 %v332
    %v370 = vunpack.c.l.b16 %v333
    %v371 = vunpack.c.l.b16 %v334
    %v372 = vunpack.c.l.b16 %v335
    %v373 = vunpack.c.l.b16 %v336
    %v374 = vunpack.c.l.b16 %v337
    %v375 = vunpack.c.l.b16 %v338
    %v376 = vunpack.c.l.b16 %v339
    %v377 = vunpack.c.l.b16 %v340
    %v378 = vunpack.c.l.b16 %v341
    %v379 = vunpack.c.l.b16 %v342
    %v380 = vpack.c.b16 %v365, %v364
    %v381 = vpack.c.b16 %v367, %v366
    %v382 = vpack.c.b16 %v369, %v368
    %v383 = vpack.c.b16 %v371, %v370
    %v384 = vpack.c.b16 %v373, %v372
    %v385 = vpack.c.b16 %v375, %v374
    %v386 = vpack.c.b16 %v377, %v376
    %v387 = vpack.c.b16 %v379, %v378
    %396 = vmatprep.subr.bf16.mxu0 0
    %397 = vmatpush1.bf16.msra.mxu0 %v387
    %398 = vmatprep.subr.bf16.mxu0 0
    %399 = vmatpush1.bf16.msra.mxu0 %v386
    %400 = vmatprep.subr.bf16.mxu0 0
    %401 = vmatpush1.bf16.msra.mxu0 %v385
    %402 = vmatprep.subr.bf16.mxu0 0
    %403 = vmatpush1.bf16.msra.mxu0 %v384
    %404 = vmatprep.subr.bf16.mxu0 0
    %405 = vmatpush1.bf16.msra.mxu0 %v383
    %406 = vmatprep.subr.bf16.mxu0 0
    %407 = vmatpush1.bf16.msra.mxu0 %v382
    %408 = vmatprep.subr.bf16.mxu0 0
    %409 = vmatpush1.bf16.msra.mxu0 %v381
    %410 = vmatprep.subr.bf16.mxu0 0
    %411 = vmatpush1.bf16.msra.mxu0 %v380
    %412 = vmatprep.subr.bf16.mxu0 0
    %413 = vmatpush2.bf16.msra.mxu0 0
    %414 = vmatprep.subr.bf16.mxu0 0
    %415 = vmatpush2.bf16.msra.mxu0 0
    %416 = vmatprep.subr.bf16.mxu0 0
    %417 = vmatpush2.bf16.msra.mxu0 0
    %418 = vmatprep.subr.bf16.mxu0 0
    %419 = vmatpush2.bf16.msra.mxu0 0
    %420 = vmatprep.subr.bf16.mxu0 0
    %421 = vmatpush2.bf16.msra.mxu0 0
    %422 = vmatprep.subr.bf16.mxu0 0
    %423 = vmatpush2.bf16.msra.mxu0 0
    %424 = vmatprep.subr.bf16.mxu0 0
    %425 = vmatpush2.bf16.msra.mxu0 0
    %426 = vmatprep.subr.bf16.mxu0 0
    %427 = vmatpush2.bf16.msra.mxu0 0
    %428 = vmatprep.mubr.bf16.mxu0 0
    %429 = vmatmul.mubr.bf16.gmra.mxu0 %v214
    %v430 = vpop.f32.mrf.mxu0
    %v431 = vadd.f32 %v347, %v430
    %v432 = vpop.f32.mrf.mxu0
    %v433 = vpop.f32.mrf.mxu0
    %v434 = vadd.f32 %v347, %v433
    %v435 = vpop.f32.mrf.mxu0
    %436 = vdwg.mxu0
    %s437 = scalar_lea.vmem [#allocation5], 320
    %v438 = vld [vmem:[%s437] sm:$0xf]
    %v439 = vld [vmem:[%s437 + $0x4] sm:$0xf]
    %v440 = vld [vmem:[%s437 + $0x8] sm:$0xf]
    %v441 = vld [vmem:[%s437 + $0xc] sm:$0xf]
    %v442 = vld [vmem:[%s437 + $0x10] sm:$0xf]
    %v443 = vld [vmem:[%s437 + $0x14] sm:$0xf]
    %v444 = vld [vmem:[%s437 + $0x18] sm:$0xf]
    %v445 = vld [vmem:[%s437 + $0x1c] sm:$0xf]
    %v446 = vld [vmem:[%s437 + $0x20] sm:$0xf]
    %v447 = vld [vmem:[%s437 + $0x24] sm:$0xf]
    %v448 = vld [vmem:[%s437 + $0x28] sm:$0xf]
    %v449 = vld [vmem:[%s437 + $0x2c] sm:$0xf]
    %v450 = vld [vmem:[%s437 + $0x30] sm:$0xf]
    %v451 = vld [vmem:[%s437 + $0x34] sm:$0xf]
    %v452 = vld [vmem:[%s437 + $0x38] sm:$0xf]
    %v453 = vld [vmem:[%s437 + $0x3c] sm:$0xf]
    %v454 = vld [vmem:[#allocation2 + $0xf] sm:$0x1]
    %v455 = vlaneseq
    %v456 = vshrl.u32 %v455, 7
    %v457 = vsub.s32 0, %v456
    %v458 = vrot.slane %v454, %v457
    %v475 = vunpack.c.l.b16 %v438
    %v476 = vunpack.c.l.b16 %v439
    %v477 = vunpack.c.l.b16 %v440
    %v478 = vunpack.c.l.b16 %v441
    %v479 = vunpack.c.l.b16 %v442
    %v480 = vunpack.c.l.b16 %v443
    %v481 = vunpack.c.l.b16 %v444
    %v482 = vunpack.c.l.b16 %v445
    %v483 = vunpack.c.l.b16 %v446
    %v484 = vunpack.c.l.b16 %v447
    %v485 = vunpack.c.l.b16 %v448
    %v486 = vunpack.c.l.b16 %v449
    %v487 = vunpack.c.l.b16 %v450
    %v488 = vunpack.c.l.b16 %v451
    %v489 = vunpack.c.l.b16 %v452
    %v490 = vunpack.c.l.b16 %v453
    %v491 = vpack.c.b16 %v476, %v475
    %v492 = vpack.c.b16 %v478, %v477
    %v493 = vpack.c.b16 %v480, %v479
    %v494 = vpack.c.b16 %v482, %v481
    %v495 = vpack.c.b16 %v484, %v483
    %v496 = vpack.c.b16 %v486, %v485
    %v497 = vpack.c.b16 %v488, %v487
    %v498 = vpack.c.b16 %v490, %v489
    %507 = vmatprep.subr.bf16.mxu0 0
    %508 = vmatpush1.bf16.msra.mxu0 %v498
    %509 = vmatprep.subr.bf16.mxu0 0
    %510 = vmatpush1.bf16.msra.mxu0 %v497
    %511 = vmatprep.subr.bf16.mxu0 0
    %512 = vmatpush1.bf16.msra.mxu0 %v496
    %513 = vmatprep.subr.bf16.mxu0 0
    %514 = vmatpush1.bf16.msra.mxu0 %v495
    %515 = vmatprep.subr.bf16.mxu0 0
    %516 = vmatpush1.bf16.msra.mxu0 %v494
    %517 = vmatprep.subr.bf16.mxu0 0
    %518 = vmatpush1.bf16.msra.mxu0 %v493
    %519 = vmatprep.subr.bf16.mxu0 0
    %520 = vmatpush1.bf16.msra.mxu0 %v492
    %521 = vmatprep.subr.bf16.mxu0 0
    %522 = vmatpush1.bf16.msra.mxu0 %v491
    %523 = vmatprep.subr.bf16.mxu0 0
    %524 = vmatpush2.bf16.msra.mxu0 0
    %525 = vmatprep.subr.bf16.mxu0 0
    %526 = vmatpush2.bf16.msra.mxu0 0
    %527 = vmatprep.subr.bf16.mxu0 0
    %528 = vmatpush2.bf16.msra.mxu0 0
    %529 = vmatprep.subr.bf16.mxu0 0
    %530 = vmatpush2.bf16.msra.mxu0 0
    %531 = vmatprep.subr.bf16.mxu0 0
    %532 = vmatpush2.bf16.msra.mxu0 0
    %533 = vmatprep.subr.bf16.mxu0 0
    %534 = vmatpush2.bf16.msra.mxu0 0
    %535 = vmatprep.subr.bf16.mxu0 0
    %536 = vmatpush2.bf16.msra.mxu0 0
    %537 = vmatprep.subr.bf16.mxu0 0
    %538 = vmatpush2.bf16.msra.mxu0 0
    %539 = vmatprep.mubr.bf16.mxu0 0
    %540 = vmatmul.mubr.bf16.gmra.mxu0 %v214
    %v541 = vpop.f32.mrf.mxu0
    %v542 = vadd.f32 %v458, %v541
    %v543 = vpop.f32.mrf.mxu0
    %v544 = vpop.f32.mrf.mxu0
    %v545 = vadd.f32 %v458, %v544
    %v546 = vpop.f32.mrf.mxu0
    %547 = vdwg.mxu0
    %548 = vmatprep.subr.mxu0 0.0
    %549 = vmatpush1.xpose.msra.mxu0 0.0
    %550 = vmatprep.subr.mxu0 0.0
    %551 = vmatpush1.xpose.msra.mxu0 0.0
    %552 = vmatprep.subr.mxu0 0.0
    %553 = vmatpush1.xpose.msra.mxu0 0.0
    %554 = vmatprep.subr.mxu0 0.0
    %555 = vmatpush1.xpose.msra.mxu0 0.0
    %556 = vmatprep.subr.mxu0 0.0
    %557 = vmatpush1.xpose.msra.mxu0 0.0
    %558 = vmatprep.subr.mxu0 0.0
    %559 = vmatpush1.xpose.msra.mxu0 0.0
    %560 = vmatprep.subr.mxu0 0.0
    %561 = vmatpush1.xpose.msra.mxu0 0.0
    %562 = vmatprep.subr.mxu0 0.0
    %563 = vmatpush1.xpose.msra.mxu0 0.0
    %564 = vmatprep.subr.mxu0 0.0
    %565 = vmatpush1.xpose.msra.mxu0 0.0
    %566 = vmatprep.subr.mxu0 0.0
    %567 = vmatpush1.xpose.msra.mxu0 0.0
    %568 = vmatprep.subr.mxu0 0.0
    %569 = vmatpush1.xpose.msra.mxu0 0.0
    %570 = vmatprep.subr.mxu0 0.0
    %571 = vmatpush1.xpose.msra.mxu0 0.0
    %572 = vmatprep.subr.mxu0 0.0
    %573 = vmatpush1.xpose.msra.mxu0 0.0
    %574 = vmatprep.subr.mxu0 0.0
    %575 = vmatpush1.xpose.msra.mxu0 0.0
    %576 = vmatprep.subr.mxu0 0.0
    %577 = vmatpush1.xpose.msra.mxu0 %v434
    %578 = vmatprep.subr.mxu0 0.0
    %579 = vmatpush1.xpose.msra.mxu0 %v431
    %580 = vmatprep.subr.mxu0 0.0
    %581 = vmatpush2.xpose.msra.mxu0 0.0
    %582 = vmatprep.subr.mxu0 0.0
    %583 = vmatpush2.xpose.msra.mxu0 0.0
    %584 = vmatprep.subr.mxu0 0.0
    %585 = vmatpush2.xpose.msra.mxu0 0.0
    %586 = vmatprep.subr.mxu0 0.0
    %587 = vmatpush2.xpose.msra.mxu0 0.0
    %588 = vmatprep.subr.mxu0 0.0
    %589 = vmatpush2.xpose.msra.mxu0 0.0
    %590 = vmatprep.subr.mxu0 0.0
    %591 = vmatpush2.xpose.msra.mxu0 0.0
    %592 = vmatprep.subr.mxu0 0.0
    %593 = vmatpush2.xpose.msra.mxu0 0.0
    %594 = vmatprep.subr.mxu0 0.0
    %595 = vmatpush2.xpose.msra.mxu0 0.0
    %596 = vmatprep.subr.mxu0 0.0
    %597 = vmatpush2.xpose.msra.mxu0 0.0
    %598 = vmatprep.subr.mxu0 0.0
    %599 = vmatpush2.xpose.msra.mxu0 0.0
    %600 = vmatprep.subr.mxu0 0.0
    %601 = vmatpush2.xpose.msra.mxu0 0.0
    %602 = vmatprep.subr.mxu0 0.0
    %603 = vmatpush2.xpose.msra.mxu0 0.0
    %604 = vmatprep.subr.mxu0 0.0
    %605 = vmatpush2.xpose.msra.mxu0 0.0
    %606 = vmatprep.subr.mxu0 0.0
    %607 = vmatpush2.xpose.msra.mxu0 0.0
    %608 = vmatprep.subr.mxu0 0.0
    %609 = vmatpush2.xpose.msra.mxu0 0.0
    %610 = vmatprep.subr.mxu0 0.0
    %611 = vmatpush2.xpose.msra.mxu0 0.0
    %612 = vmatprep.mubr.f32.mxu0 0.0
    %613 = vmatmul.mubr.f32.gmra.mxu0 %v320
    %v614 = vpop.f32.mrf.mxu0
    %v615 = vadd.f32 0.0, %v614
    %v616 = vpop.f32.mrf.mxu0
    %617 = vmatprep.mubr.f32.mxu0 0.0
    %618 = vmatmul.mubr.f32.gmra.mxu0 %v323
    %v619 = vpop.f32.mrf.mxu0
    %v620 = vadd.f32 0.0, %v619
    %v621 = vpop.f32.mrf.mxu0
    %622 = vdwg.mxu0
    %v623 = vmul.f32 %v615, 0.25
    %v624 = vmul.f32 %v620, 0.25
    %v625 = vadd.f32 %v623, %v212
    %v626 = vadd.f32 %v624, %v213
    %vm627 = vcmask 130048
    %v628 = vsel %vm627, %v625, -inf
    %629 = vmax.xlane.f32.xlu0 %v628
    %v630 = vpop.xlane.xlu0 %629
    %v631 = vsel %vm627, %v626, -inf
    %632 = vmax.xlane.f32.xlu0 %v631
    %v633 = vpop.xlane.xlu0 %632
    %v634 = vsub.f32 %v625, %v630
    %v635 = vsub.f32 %v626, %v633
    %v636 = vmul.f32 %v634, 1.442695
    %v637 = vpow.pop %v636
    %v638 = vmul.f32 %v635, 1.442695
    %v639 = vpow.pop %v638
    %v640 = vsel %vm627, %v637, 0.0
    %641 = vadd.xlane.f32.xlu0 %v640
    %v642 = vpop.xlane.xlu0 %641
    %v643 = vsel %vm627, %v639, 0.0
    %644 = vadd.xlane.f32.xlu0 %v643
    %v645 = vpop.xlane.xlu0 %644
    %v646 = vrcp.pop %v642
    %v647 = vrcp.pop %v645
    %v648 = vmul.f32 %v637, %v646
    %v649 = vmul.f32 %v639, %v647
    %v651 = vsel %vm627, %v648, 0
    %v654 = vsel %vm627, %v649, 0
    %656 = vmatprep.subr.mxu0 0.0
    %657 = vmatpush1.msra.mxu0 0.0
    %658 = vmatprep.subr.mxu0 0.0
    %659 = vmatpush1.msra.mxu0 0.0
    %660 = vmatprep.subr.mxu0 0.0
    %661 = vmatpush1.msra.mxu0 0.0
    %662 = vmatprep.subr.mxu0 0.0
    %663 = vmatpush1.msra.mxu0 0.0
    %664 = vmatprep.subr.mxu0 0.0
    %665 = vmatpush1.msra.mxu0 0.0
    %666 = vmatprep.subr.mxu0 0.0
    %667 = vmatpush1.msra.mxu0 0.0
    %668 = vmatprep.subr.mxu0 0.0
    %669 = vmatpush1.msra.mxu0 0.0
    %670 = vmatprep.subr.mxu0 0.0
    %671 = vmatpush1.msra.mxu0 0.0
    %672 = vmatprep.subr.mxu0 0.0
    %673 = vmatpush1.msra.mxu0 0.0
    %674 = vmatprep.subr.mxu0 0.0
    %675 = vmatpush1.msra.mxu0 0.0
    %676 = vmatprep.subr.mxu0 0.0
    %677 = vmatpush1.msra.mxu0 0.0
    %678 = vmatprep.subr.mxu0 0.0
    %679 = vmatpush1.msra.mxu0 0.0
    %680 = vmatprep.subr.mxu0 0.0
    %681 = vmatpush1.msra.mxu0 0.0
    %682 = vmatprep.subr.mxu0 0.0
    %683 = vmatpush1.msra.mxu0 0.0
    %684 = vmatprep.subr.mxu0 0.0
    %685 = vmatpush1.msra.mxu0 %v545
    %686 = vmatprep.subr.mxu0 0.0
    %687 = vmatpush1.msra.mxu0 %v542
    %688 = vmatprep.subr.mxu0 0.0
    %689 = vmatpush2.msra.mxu0 0.0
    %690 = vmatprep.subr.mxu0 0.0
    %691 = vmatpush2.msra.mxu0 0.0
    %692 = vmatprep.subr.mxu0 0.0
    %693 = vmatpush2.msra.mxu0 0.0
    %694 = vmatprep.subr.mxu0 0.0
    %695 = vmatpush2.msra.mxu0 0.0
    %696 = vmatprep.subr.mxu0 0.0
    %697 = vmatpush2.msra.mxu0 0.0
    %698 = vmatprep.subr.mxu0 0.0
    %699 = vmatpush2.msra.mxu0 0.0
    %700 = vmatprep.subr.mxu0 0.0
    %701 = vmatpush2.msra.mxu0 0.0
    %702 = vmatprep.subr.mxu0 0.0
    %703 = vmatpush2.msra.mxu0 0.0
    %704 = vmatprep.subr.mxu0 0.0
    %705 = vmatpush2.msra.mxu0 0.0
    %706 = vmatprep.subr.mxu0 0.0
    %707 = vmatpush2.msra.mxu0 0.0
    %708 = vmatprep.subr.mxu0 0.0
    %709 = vmatpush2.msra.mxu0 0.0
    %710 = vmatprep.subr.mxu0 0.0
    %711 = vmatpush2.msra.mxu0 0.0
    %712 = vmatprep.subr.mxu0 0.0
    %713 = vmatpush2.msra.mxu0 0.0
    %714 = vmatprep.subr.mxu0 0.0
    %715 = vmatpush2.msra.mxu0 0.0
    %716 = vmatprep.subr.mxu0 0.0
    %717 = vmatpush2.msra.mxu0 0.0
    %718 = vmatprep.subr.mxu0 0.0
    %719 = vmatpush2.msra.mxu0 0.0
    %720 = vmatprep.mubr.f32.mxu0 0.0
    %721 = vmatmul.mubr.f32.gmra.mxu0 %v651
    %v722 = vpop.f32.mrf.mxu0
    %v723 = vadd.f32 0.0, %v722
    %v724 = vpop.f32.mrf.mxu0
    %725 = vmatprep.mubr.f32.mxu0 0.0
    %726 = vmatmul.mubr.f32.gmra.mxu0 %v654
    %v727 = vpop.f32.mrf.mxu0
    %v728 = vadd.f32 0.0, %v727
    %v729 = vpop.f32.mrf.mxu0
    %730 = vdwg.mxu0
    %v731 = vpack.c.bf16 %v728, %v723
    %s732 = scalar_lea.vmem [#allocation5], 448
    %v733 = vld [vmem:[%s732] sm:$0xf]
    %v734 = vld [vmem:[%s732 + $0x4] sm:$0xf]
    %v735 = vld [vmem:[%s732 + $0x8] sm:$0xf]
    %v736 = vld [vmem:[%s732 + $0xc] sm:$0xf]
    %v737 = vld [vmem:[%s732 + $0x10] sm:$0xf]
    %v738 = vld [vmem:[%s732 + $0x14] sm:$0xf]
    %v739 = vld [vmem:[%s732 + $0x18] sm:$0xf]
    %v740 = vld [vmem:[%s732 + $0x1c] sm:$0xf]
    %v741 = vld [vmem:[%s732 + $0x20] sm:$0xf]
    %v742 = vld [vmem:[%s732 + $0x24] sm:$0xf]
    %v743 = vld [vmem:[%s732 + $0x28] sm:$0xf]
    %v744 = vld [vmem:[%s732 + $0x2c] sm:$0xf]
    %v745 = vld [vmem:[%s732 + $0x30] sm:$0xf]
    %v746 = vld [vmem:[%s732 + $0x34] sm:$0xf]
    %v747 = vld [vmem:[%s732 + $0x38] sm:$0xf]
    %v748 = vld [vmem:[%s732 + $0x3c] sm:$0xf]
    %s749 = scalar_lea.vmem [#allocation5], 128
    %v750 = vld [vmem:[%s749] sm:$0xf]
    %v751 = vld [vmem:[%s749 + $0x4] sm:$0xf]
    %v752 = vld [vmem:[%s749 + $0x8] sm:$0xf]
    %v753 = vld [vmem:[%s749 + $0xc] sm:$0xf]
    %v754 = vld [vmem:[%s749 + $0x10] sm:$0xf]
    %v755 = vld [vmem:[%s749 + $0x14] sm:$0xf]
    %v756 = vld [vmem:[%s749 + $0x18] sm:$0xf]
    %v757 = vld [vmem:[%s749 + $0x1c] sm:$0xf]
    %v758 = vld [vmem:[%s749 + $0x20] sm:$0xf]
    %v759 = vld [vmem:[%s749 + $0x24] sm:$0xf]
    %v760 = vld [vmem:[%s749 + $0x28] sm:$0xf]
    %v761 = vld [vmem:[%s749 + $0x2c] sm:$0xf]
    %v762 = vld [vmem:[%s749 + $0x30] sm:$0xf]
    %v763 = vld [vmem:[%s749 + $0x34] sm:$0xf]
    %v764 = vld [vmem:[%s749 + $0x38] sm:$0xf]
    %v765 = vld [vmem:[%s749 + $0x3c] sm:$0xf]
    %v766 = vld [vmem:[#allocation2 + $0xc] sm:$0x1]
    %v767 = vlaneseq
    %v768 = vshrl.u32 %v767, 7
    %v769 = vsub.s32 0, %v768
    %v770 = vrot.slane %v766, %v769
    %v787 = vunpack.c.l.b16 %v750
    %v788 = vunpack.c.l.b16 %v751
    %v789 = vunpack.c.l.b16 %v752
    %v790 = vunpack.c.l.b16 %v753
    %v791 = vunpack.c.l.b16 %v754
    %v792 = vunpack.c.l.b16 %v755
    %v793 = vunpack.c.l.b16 %v756
    %v794 = vunpack.c.l.b16 %v757
    %v795 = vunpack.c.l.b16 %v758
    %v796 = vunpack.c.l.b16 %v759
    %v797 = vunpack.c.l.b16 %v760
    %v798 = vunpack.c.l.b16 %v761
    %v799 = vunpack.c.l.b16 %v762
    %v800 = vunpack.c.l.b16 %v763
    %v801 = vunpack.c.l.b16 %v764
    %v802 = vunpack.c.l.b16 %v765
    %v803 = vpack.c.b16 %v788, %v787
    %v804 = vpack.c.b16 %v790, %v789
    %v805 = vpack.c.b16 %v792, %v791
    %v806 = vpack.c.b16 %v794, %v793
    %v807 = vpack.c.b16 %v796, %v795
    %v808 = vpack.c.b16 %v798, %v797
    %v809 = vpack.c.b16 %v800, %v799
    %v810 = vpack.c.b16 %v802, %v801
    %819 = vmatprep.subr.bf16.mxu0 0
    %820 = vmatpush1.bf16.msra.mxu0 %v810
    %821 = vmatprep.subr.bf16.mxu0 0
    %822 = vmatpush1.bf16.msra.mxu0 %v809
    %823 = vmatprep.subr.bf16.mxu0 0
    %824 = vmatpush1.bf16.msra.mxu0 %v808
    %825 = vmatprep.subr.bf16.mxu0 0
    %826 = vmatpush1.bf16.msra.mxu0 %v807
    %827 = vmatprep.subr.bf16.mxu0 0
    %828 = vmatpush1.bf16.msra.mxu0 %v806
    %829 = vmatprep.subr.bf16.mxu0 0
    %830 = vmatpush1.bf16.msra.mxu0 %v805
    %831 = vmatprep.subr.bf16.mxu0 0
    %832 = vmatpush1.bf16.msra.mxu0 %v804
    %833 = vmatprep.subr.bf16.mxu0 0
    %834 = vmatpush1.bf16.msra.mxu0 %v803
    %835 = vmatprep.subr.bf16.mxu0 0
    %836 = vmatpush2.bf16.msra.mxu0 0
    %837 = vmatprep.subr.bf16.mxu0 0
    %838 = vmatpush2.bf16.msra.mxu0 0
    %839 = vmatprep.subr.bf16.mxu0 0
    %840 = vmatpush2.bf16.msra.mxu0 0
    %841 = vmatprep.subr.bf16.mxu0 0
    %842 = vmatpush2.bf16.msra.mxu0 0
    %843 = vmatprep.subr.bf16.mxu0 0
    %844 = vmatpush2.bf16.msra.mxu0 0
    %845 = vmatprep.subr.bf16.mxu0 0
    %846 = vmatpush2.bf16.msra.mxu0 0
    %847 = vmatprep.subr.bf16.mxu0 0
    %848 = vmatpush2.bf16.msra.mxu0 0
    %849 = vmatprep.subr.bf16.mxu0 0
    %850 = vmatpush2.bf16.msra.mxu0 0
    %851 = vmatprep.mubr.bf16.mxu0 0
    %852 = vmatmul.mubr.bf16.gmra.mxu0 %v214
    %v853 = vpop.f32.mrf.mxu0
    %v854 = vadd.f32 %v770, %v853
    %v855 = vpop.f32.mrf.mxu0
    %v856 = vpop.f32.mrf.mxu0
    %v857 = vadd.f32 %v770, %v856
    %v858 = vpop.f32.mrf.mxu0
    %859 = vdwg.mxu0
    %s860 = scalar_lea.vmem [#allocation5], 256
    %v861 = vld [vmem:[%s860] sm:$0xf]
    %v862 = vld [vmem:[%s860 + $0x4] sm:$0xf]
    %v863 = vld [vmem:[%s860 + $0x8] sm:$0xf]
    %v864 = vld [vmem:[%s860 + $0xc] sm:$0xf]
    %v865 = vld [vmem:[%s860 + $0x10] sm:$0xf]
    %v866 = vld [vmem:[%s860 + $0x14] sm:$0xf]
    %v867 = vld [vmem:[%s860 + $0x18] sm:$0xf]
    %v868 = vld [vmem:[%s860 + $0x1c] sm:$0xf]
    %v869 = vld [vmem:[%s860 + $0x20] sm:$0xf]
    %v870 = vld [vmem:[%s860 + $0x24] sm:$0xf]
    %v871 = vld [vmem:[%s860 + $0x28] sm:$0xf]
    %v872 = vld [vmem:[%s860 + $0x2c] sm:$0xf]
    %v873 = vld [vmem:[%s860 + $0x30] sm:$0xf]
    %v874 = vld [vmem:[%s860 + $0x34] sm:$0xf]
    %v875 = vld [vmem:[%s860 + $0x38] sm:$0xf]
    %v876 = vld [vmem:[%s860 + $0x3c] sm:$0xf]
    %v877 = vld [vmem:[#allocation2 + $0xe] sm:$0x1]
    %v878 = vlaneseq
    %v879 = vshrl.u32 %v878, 7
    %v880 = vsub.s32 0, %v879
    %v881 = vrot.slane %v877, %v880
    %v898 = vunpack.c.l.b16 %v861
    %v899 = vunpack.c.l.b16 %v862
    %v900 = vunpack.c.l.b16 %v863
    %v901 = vunpack.c.l.b16 %v864
    %v902 = vunpack.c.l.b16 %v865
    %v903 = vunpack.c.l.b16 %v866
    %v904 = vunpack.c.l.b16 %v867
    %v905 = vunpack.c.l.b16 %v868
    %v906 = vunpack.c.l.b16 %v869
    %v907 = vunpack.c.l.b16 %v870
    %v908 = vunpack.c.l.b16 %v871
    %v909 = vunpack.c.l.b16 %v872
    %v910 = vunpack.c.l.b16 %v873
    %v911 = vunpack.c.l.b16 %v874
    %v912 = vunpack.c.l.b16 %v875
    %v913 = vunpack.c.l.b16 %v876
    %v914 = vpack.c.b16 %v899, %v898
    %v915 = vpack.c.b16 %v901, %v900
    %v916 = vpack.c.b16 %v903, %v902
    %v917 = vpack.c.b16 %v905, %v904
    %v918 = vpack.c.b16 %v907, %v906
    %v919 = vpack.c.b16 %v909, %v908
    %v920 = vpack.c.b16 %v911, %v910
    %v921 = vpack.c.b16 %v913, %v912
    %930 = vmatprep.subr.bf16.mxu0 0
    %931 = vmatpush1.bf16.msra.mxu0 %v921
    %932 = vmatprep.subr.bf16.mxu0 0
    %933 = vmatpush1.bf16.msra.mxu0 %v920
    %934 = vmatprep.subr.bf16.mxu0 0
    %935 = vmatpush1.bf16.msra.mxu0 %v919
    %936 = vmatprep.subr.bf16.mxu0 0
    %937 = vmatpush1.bf16.msra.mxu0 %v918
    %938 = vmatprep.subr.bf16.mxu0 0
    %939 = vmatpush1.bf16.msra.mxu0 %v917
    %940 = vmatprep.subr.bf16.mxu0 0
    %941 = vmatpush1.bf16.msra.mxu0 %v916
    %942 = vmatprep.subr.bf16.mxu0 0
    %943 = vmatpush1.bf16.msra.mxu0 %v915
    %944 = vmatprep.subr.bf16.mxu0 0
    %945 = vmatpush1.bf16.msra.mxu0 %v914
    %946 = vmatprep.subr.bf16.mxu0 0
    %947 = vmatpush2.bf16.msra.mxu0 0
    %948 = vmatprep.subr.bf16.mxu0 0
    %949 = vmatpush2.bf16.msra.mxu0 0
    %950 = vmatprep.subr.bf16.mxu0 0
    %951 = vmatpush2.bf16.msra.mxu0 0
    %952 = vmatprep.subr.bf16.mxu0 0
    %953 = vmatpush2.bf16.msra.mxu0 0
    %954 = vmatprep.subr.bf16.mxu0 0
    %955 = vmatpush2.bf16.msra.mxu0 0
    %956 = vmatprep.subr.bf16.mxu0 0
    %957 = vmatpush2.bf16.msra.mxu0 0
    %958 = vmatprep.subr.bf16.mxu0 0
    %959 = vmatpush2.bf16.msra.mxu0 0
    %960 = vmatprep.subr.bf16.mxu0 0
    %961 = vmatpush2.bf16.msra.mxu0 0
    %962 = vmatprep.mubr.bf16.mxu0 0
    %963 = vmatmul.mubr.bf16.gmra.mxu0 %v214
    %v964 = vpop.f32.mrf.mxu0
    %v965 = vadd.f32 %v881, %v964
    %v966 = vpop.f32.mrf.mxu0
    %v967 = vpop.f32.mrf.mxu0
    %v968 = vadd.f32 %v881, %v967
    %v969 = vpop.f32.mrf.mxu0
    %970 = vdwg.mxu0
    %s971 = scalar_lea.vmem [#allocation5], 384
    %v972 = vld [vmem:[%s971] sm:$0xf]
    %v973 = vld [vmem:[%s971 + $0x4] sm:$0xf]
    %v974 = vld [vmem:[%s971 + $0x8] sm:$0xf]
    %v975 = vld [vmem:[%s971 + $0xc] sm:$0xf]
    %v976 = vld [vmem:[%s971 + $0x10] sm:$0xf]
    %v977 = vld [vmem:[%s971 + $0x14] sm:$0xf]
    %v978 = vld [vmem:[%s971 + $0x18] sm:$0xf]
    %v979 = vld [vmem:[%s971 + $0x1c] sm:$0xf]
    %v980 = vld [vmem:[%s971 + $0x20] sm:$0xf]
    %v981 = vld [vmem:[%s971 + $0x24] sm:$0xf]
    %v982 = vld [vmem:[%s971 + $0x28] sm:$0xf]
    %v983 = vld [vmem:[%s971 + $0x2c] sm:$0xf]
    %v984 = vld [vmem:[%s971 + $0x30] sm:$0xf]
    %v985 = vld [vmem:[%s971 + $0x34] sm:$0xf]
    %v986 = vld [vmem:[%s971 + $0x38] sm:$0xf]
    %v987 = vld [vmem:[%s971 + $0x3c] sm:$0xf]
    %v988 = vld [vmem:[#allocation2 + $0x10] sm:$0x1]
    %v989 = vlaneseq
    %v990 = vshrl.u32 %v989, 7
    %v991 = vsub.s32 0, %v990
    %v992 = vrot.slane %v988, %v991
    %v1009 = vunpack.c.l.b16 %v972
    %v1010 = vunpack.c.l.b16 %v973
    %v1011 = vunpack.c.l.b16 %v974
    %v1012 = vunpack.c.l.b16 %v975
    %v1013 = vunpack.c.l.b16 %v976
    %v1014 = vunpack.c.l.b16 %v977
    %v1015 = vunpack.c.l.b16 %v978
    %v1016 = vunpack.c.l.b16 %v979
    %v1017 = vunpack.c.l.b16 %v980
    %v1018 = vunpack.c.l.b16 %v981
    %v1019 = vunpack.c.l.b16 %v982
    %v1020 = vunpack.c.l.b16 %v983
    %v1021 = vunpack.c.l.b16 %v984
    %v1022 = vunpack.c.l.b16 %v985
    %v1023 = vunpack.c.l.b16 %v986
    %v1024 = vunpack.c.l.b16 %v987
    %v1025 = vpack.c.b16 %v1010, %v1009
    %v1026 = vpack.c.b16 %v1012, %v1011
    %v1027 = vpack.c.b16 %v1014, %v1013
    %v1028 = vpack.c.b16 %v1016, %v1015
    %v1029 = vpack.c.b16 %v1018, %v1017
    %v1030 = vpack.c.b16 %v1020, %v1019
    %v1031 = vpack.c.b16 %v1022, %v1021
    %v1032 = vpack.c.b16 %v1024, %v1023
    %1041 = vmatprep.subr.bf16.mxu0 0
    %1042 = vmatpush1.bf16.msra.mxu0 %v1032
    %1043 = vmatprep.subr.bf16.mxu0 0
    %1044 = vmatpush1.bf16.msra.mxu0 %v1031
    %1045 = vmatprep.subr.bf16.mxu0 0
    %1046 = vmatpush1.bf16.msra.mxu0 %v1030
    %1047 = vmatprep.subr.bf16.mxu0 0
    %1048 = vmatpush1.bf16.msra.mxu0 %v1029
    %1049 = vmatprep.subr.bf16.mxu0 0
    %1050 = vmatpush1.bf16.msra.mxu0 %v1028
    %1051 = vmatprep.subr.bf16.mxu0 0
    %1052 = vmatpush1.bf16.msra.mxu0 %v1027
    %1053 = vmatprep.subr.bf16.mxu0 0
    %1054 = vmatpush1.bf16.msra.mxu0 %v1026
    %1055 = vmatprep.subr.bf16.mxu0 0
    %1056 = vmatpush1.bf16.msra.mxu0 %v1025
    %1057 = vmatprep.subr.bf16.mxu0 0
    %1058 = vmatpush2.bf16.msra.mxu0 0
    %1059 = vmatprep.subr.bf16.mxu0 0
    %1060 = vmatpush2.bf16.msra.mxu0 0
    %1061 = vmatprep.subr.bf16.mxu0 0
    %1062 = vmatpush2.bf16.msra.mxu0 0
    %1063 = vmatprep.subr.bf16.mxu0 0
    %1064 = vmatpush2.bf16.msra.mxu0 0
    %1065 = vmatprep.subr.bf16.mxu0 0
    %1066 = vmatpush2.bf16.msra.mxu0 0
    %1067 = vmatprep.subr.bf16.mxu0 0
    %1068 = vmatpush2.bf16.msra.mxu0 0
    %1069 = vmatprep.subr.bf16.mxu0 0
    %1070 = vmatpush2.bf16.msra.mxu0 0
    %1071 = vmatprep.subr.bf16.mxu0 0
    %1072 = vmatpush2.bf16.msra.mxu0 0
    %1073 = vmatprep.mubr.bf16.mxu0 0
    %1074 = vmatmul.mubr.bf16.gmra.mxu0 %v214
    %v1075 = vpop.f32.mrf.mxu0
    %v1076 = vadd.f32 %v992, %v1075
    %v1077 = vpop.f32.mrf.mxu0
    %v1078 = vpop.f32.mrf.mxu0
    %v1079 = vadd.f32 %v992, %v1078
    %v1080 = vpop.f32.mrf.mxu0
    %1081 = vdwg.mxu0
    %1082 = vmatprep.subr.mxu0 0.0
    %1083 = vmatpush1.xpose.msra.mxu0 0.0
    %1084 = vmatprep.subr.mxu0 0.0
    %1085 = vmatpush1.xpose.msra.mxu0 0.0
    %1086 = vmatprep.subr.mxu0 0.0
    %1087 = vmatpush1.xpose.msra.mxu0 0.0
    %1088 = vmatprep.subr.mxu0 0.0
    %1089 = vmatpush1.xpose.msra.mxu0 0.0
    %1090 = vmatprep.subr.mxu0 0.0
    %1091 = vmatpush1.xpose.msra.mxu0 0.0
    %1092 = vmatprep.subr.mxu0 0.0
    %1093 = vmatpush1.xpose.msra.mxu0 0.0
    %1094 = vmatprep.subr.mxu0 0.0
    %1095 = vmatpush1.xpose.msra.mxu0 0.0
    %1096 = vmatprep.subr.mxu0 0.0
    %1097 = vmatpush1.xpose.msra.mxu0 0.0
    %1098 = vmatprep.subr.mxu0 0.0
    %1099 = vmatpush1.xpose.msra.mxu0 0.0
    %1100 = vmatprep.subr.mxu0 0.0
    %1101 = vmatpush1.xpose.msra.mxu0 0.0
    %1102 = vmatprep.subr.mxu0 0.0
    %1103 = vmatpush1.xpose.msra.mxu0 0.0
    %1104 = vmatprep.subr.mxu0 0.0
    %1105 = vmatpush1.xpose.msra.mxu0 0.0
    %1106 = vmatprep.subr.mxu0 0.0
    %1107 = vmatpush1.xpose.msra.mxu0 0.0
    %1108 = vmatprep.subr.mxu0 0.0
    %1109 = vmatpush1.xpose.msra.mxu0 0.0
    %1110 = vmatprep.subr.mxu0 0.0
    %1111 = vmatpush1.xpose.msra.mxu0 %v968
    %1112 = vmatprep.subr.mxu0 0.0
    %1113 = vmatpush1.xpose.msra.mxu0 %v965
    %1114 = vmatprep.subr.mxu0 0.0
    %1115 = vmatpush2.xpose.msra.mxu0 0.0
    %1116 = vmatprep.subr.mxu0 0.0
    %1117 = vmatpush2.xpose.msra.mxu0 0.0
    %1118 = vmatprep.subr.mxu0 0.0
    %1119 = vmatpush2.xpose.msra.mxu0 0.0
    %1120 = vmatprep.subr.mxu0 0.0
    %1121 = vmatpush2.xpose.msra.mxu0 0.0
    %1122 = vmatprep.subr.mxu0 0.0
    %1123 = vmatpush2.xpose.msra.mxu0 0.0
    %1124 = vmatprep.subr.mxu0 0.0
    %1125 = vmatpush2.xpose.msra.mxu0 0.0
    %1126 = vmatprep.subr.mxu0 0.0
    %1127 = vmatpush2.xpose.msra.mxu0 0.0
    %1128 = vmatprep.subr.mxu0 0.0
    %1129 = vmatpush2.xpose.msra.mxu0 0.0
    %1130 = vmatprep.subr.mxu0 0.0
    %1131 = vmatpush2.xpose.msra.mxu0 0.0
    %1132 = vmatprep.subr.mxu0 0.0
    %1133 = vmatpush2.xpose.msra.mxu0 0.0
    %1134 = vmatprep.subr.mxu0 0.0
    %1135 = vmatpush2.xpose.msra.mxu0 0.0
    %1136 = vmatprep.subr.mxu0 0.0
    %1137 = vmatpush2.xpose.msra.mxu0 0.0
    %1138 = vmatprep.subr.mxu0 0.0
    %1139 = vmatpush2.xpose.msra.mxu0 0.0
    %1140 = vmatprep.subr.mxu0 0.0
    %1141 = vmatpush2.xpose.msra.mxu0 0.0
    %1142 = vmatprep.subr.mxu0 0.0
    %1143 = vmatpush2.xpose.msra.mxu0 0.0
    %1144 = vmatprep.subr.mxu0 0.0
    %1145 = vmatpush2.xpose.msra.mxu0 0.0
    %1146 = vmatprep.mubr.f32.mxu0 0.0
    %1147 = vmatmul.mubr.f32.gmra.mxu0 %v854
    %v1148 = vpop.f32.mrf.mxu0
    %v1149 = vadd.f32 0.0, %v1148
    %v1150 = vpop.f32.mrf.mxu0
    %1151 = vmatprep.mubr.f32.mxu0 0.0
    %1152 = vmatmul.mubr.f32.gmra.mxu0 %v857
    %v1153 = vpop.f32.mrf.mxu0
    %v1154 = vadd.f32 0.0, %v1153
    %v1155 = vpop.f32.mrf.mxu0
    %1156 = vdwg.mxu0
    %v1157 = vmul.f32 %v1149, 0.25
    %v1158 = vmul.f32 %v1154, 0.25
    %v1159 = vadd.f32 %v1157, %v212
    %v1160 = vadd.f32 %v1158, %v213
    %v1161 = vsel %vm627, %v1159, -inf
    %1162 = vmax.xlane.f32.xlu0 %v1161
    %v1163 = vpop.xlane.xlu0 %1162
    %v1164 = vsel %vm627, %v1160, -inf
    %1165 = vmax.xlane.f32.xlu0 %v1164
    %v1166 = vpop.xlane.xlu0 %1165
    %v1167 = vsub.f32 %v1159, %v1163
    %v1168 = vsub.f32 %v1160, %v1166
    %v1169 = vmul.f32 %v1167, 1.442695
    %v1170 = vpow.pop %v1169
    %v1171 = vmul.f32 %v1168, 1.442695
    %v1172 = vpow.pop %v1171
    %v1173 = vsel %vm627, %v1170, 0.0
    %1174 = vadd.xlane.f32.xlu0 %v1173
    %v1175 = vpop.xlane.xlu0 %1174
    %v1176 = vsel %vm627, %v1172, 0.0
    %1177 = vadd.xlane.f32.xlu0 %v1176
    %v1178 = vpop.xlane.xlu0 %1177
    %v1179 = vrcp.pop %v1175
    %v1180 = vrcp.pop %v1178
    %v1181 = vmul.f32 %v1170, %v1179
    %v1182 = vmul.f32 %v1172, %v1180
    %v1184 = vsel %vm627, %v1181, 0
    %v1187 = vsel %vm627, %v1182, 0
    %1189 = vmatprep.subr.mxu0 0.0
    %1190 = vmatpush1.msra.mxu0 0.0
    %1191 = vmatprep.subr.mxu0 0.0
    %1192 = vmatpush1.msra.mxu0 0.0
    %1193 = vmatprep.subr.mxu0 0.0
    %1194 = vmatpush1.msra.mxu0 0.0
    %1195 = vmatprep.subr.mxu0 0.0
    %1196 = vmatpush1.msra.mxu0 0.0
    %1197 = vmatprep.subr.mxu0 0.0
    %1198 = vmatpush1.msra.mxu0 0.0
    %1199 = vmatprep.subr.mxu0 0.0
    %1200 = vmatpush1.msra.mxu0 0.0
    %1201 = vmatprep.subr.mxu0 0.0
    %1202 = vmatpush1.msra.mxu0 0.0
    %1203 = vmatprep.subr.mxu0 0.0
    %1204 = vmatpush1.msra.mxu0 0.0
    %1205 = vmatprep.subr.mxu0 0.0
    %1206 = vmatpush1.msra.mxu0 0.0
    %1207 = vmatprep.subr.mxu0 0.0
    %1208 = vmatpush1.msra.mxu0 0.0
    %1209 = vmatprep.subr.mxu0 0.0
    %1210 = vmatpush1.msra.mxu0 0.0
    %1211 = vmatprep.subr.mxu0 0.0
    %1212 = vmatpush1.msra.mxu0 0.0
    %1213 = vmatprep.subr.mxu0 0.0
    %1214 = vmatpush1.msra.mxu0 0.0
    %1215 = vmatprep.subr.mxu0 0.0
    %1216 = vmatpush1.msra.mxu0 0.0
    %1217 = vmatprep.subr.mxu0 0.0
    %1218 = vmatpush1.msra.mxu0 %v1079
    %1219 = vmatprep.subr.mxu0 0.0
    %1220 = vmatpush1.msra.mxu0 %v1076
    %1221 = vmatprep.subr.mxu0 0.0
    %1222 = vmatpush2.msra.mxu0 0.0
    %1223 = vmatprep.subr.mxu0 0.0
    %1224 = vmatpush2.msra.mxu0 0.0
    %1225 = vmatprep.subr.mxu0 0.0
    %1226 = vmatpush2.msra.mxu0 0.0
    %1227 = vmatprep.subr.mxu0 0.0
    %1228 = vmatpush2.msra.mxu0 0.0
    %1229 = vmatprep.subr.mxu0 0.0
    %1230 = vmatpush2.msra.mxu0 0.0
    %1231 = vmatprep.subr.mxu0 0.0
    %1232 = vmatpush2.msra.mxu0 0.0
    %1233 = vmatprep.subr.mxu0 0.0
    %1234 = vmatpush2.msra.mxu0 0.0
    %1235 = vmatprep.subr.mxu0 0.0
    %1236 = vmatpush2.msra.mxu0 0.0
    %1237 = vmatprep.subr.mxu0 0.0
    %1238 = vmatpush2.msra.mxu0 0.0
    %1239 = vmatprep.subr.mxu0 0.0
    %1240 = vmatpush2.msra.mxu0 0.0
    %1241 = vmatprep.subr.mxu0 0.0
    %1242 = vmatpush2.msra.mxu0 0.0
    %1243 = vmatprep.subr.mxu0 0.0
    %1244 = vmatpush2.msra.mxu0 0.0
    %1245 = vmatprep.subr.mxu0 0.0
    %1246 = vmatpush2.msra.mxu0 0.0
    %1247 = vmatprep.subr.mxu0 0.0
    %1248 = vmatpush2.msra.mxu0 0.0
    %1249 = vmatprep.subr.mxu0 0.0
    %1250 = vmatpush2.msra.mxu0 0.0
    %1251 = vmatprep.subr.mxu0 0.0
    %1252 = vmatpush2.msra.mxu0 0.0
    %1253 = vmatprep.mubr.f32.mxu0 0.0
    %1254 = vmatmul.mubr.f32.gmra.mxu0 %v1184
    %v1255 = vpop.f32.mrf.mxu0
    %v1256 = vadd.f32 0.0, %v1255
    %v1257 = vpop.f32.mrf.mxu0
    %1258 = vmatprep.mubr.f32.mxu0 0.0
    %1259 = vmatmul.mubr.f32.gmra.mxu0 %v1187
    %v1260 = vpop.f32.mrf.mxu0
    %v1261 = vadd.f32 0.0, %v1260
    %v1262 = vpop.f32.mrf.mxu0
    %1263 = vdwg.mxu0
    %v1264 = vpack.c.bf16 %v1261, %v1256
    %s1265 = scalar_lea.vmem [#allocation5], 512
    %v1266 = vld [vmem:[%s1265] sm:$0xf]
    %v1267 = vld [vmem:[%s1265 + $0x4] sm:$0xf]
    %v1268 = vld [vmem:[%s1265 + $0x8] sm:$0xf]
    %v1269 = vld [vmem:[%s1265 + $0xc] sm:$0xf]
    %v1270 = vld [vmem:[%s1265 + $0x10] sm:$0xf]
    %v1271 = vld [vmem:[%s1265 + $0x14] sm:$0xf]
    %v1272 = vld [vmem:[%s1265 + $0x18] sm:$0xf]
    %v1273 = vld [vmem:[%s1265 + $0x1c] sm:$0xf]
    %v1274 = vld [vmem:[%s1265 + $0x20] sm:$0xf]
    %v1275 = vld [vmem:[%s1265 + $0x24] sm:$0xf]
    %v1276 = vld [vmem:[%s1265 + $0x28] sm:$0xf]
    %v1277 = vld [vmem:[%s1265 + $0x2c] sm:$0xf]
    %v1278 = vld [vmem:[%s1265 + $0x30] sm:$0xf]
    %v1279 = vld [vmem:[%s1265 + $0x34] sm:$0xf]
    %v1280 = vld [vmem:[%s1265 + $0x38] sm:$0xf]
    %v1281 = vld [vmem:[%s1265 + $0x3c] sm:$0xf]
    %v1298 = vunpack.c.l.b16 %v1266
    %v1299 = vunpack.c.l.b16 %v1267
    %v1300 = vunpack.c.l.b16 %v1268
    %v1301 = vunpack.c.l.b16 %v1269
    %v1302 = vunpack.c.l.b16 %v1270
    %v1303 = vunpack.c.l.b16 %v1271
    %v1304 = vunpack.c.l.b16 %v1272
    %v1305 = vunpack.c.l.b16 %v1273
    %v1306 = vunpack.c.l.b16 %v1274
    %v1307 = vunpack.c.l.b16 %v1275
    %v1308 = vunpack.c.l.b16 %v1276
    %v1309 = vunpack.c.l.b16 %v1277
    %v1310 = vunpack.c.l.b16 %v1278
    %v1311 = vunpack.c.l.b16 %v1279
    %v1312 = vunpack.c.l.b16 %v1280
    %v1313 = vunpack.c.l.b16 %v1281
    %v1314 = vpack.c.b16 %v1299, %v1298
    %v1315 = vpack.c.b16 %v1301, %v1300
    %v1316 = vpack.c.b16 %v1303, %v1302
    %v1317 = vpack.c.b16 %v1305, %v1304
    %v1318 = vpack.c.b16 %v1307, %v1306
    %v1319 = vpack.c.b16 %v1309, %v1308
    %v1320 = vpack.c.b16 %v1311, %v1310
    %v1321 = vpack.c.b16 %v1313, %v1312
    %1330 = vmatprep.subr.bf16.mxu0 0
    %1331 = vmatpush1.bf16.msra.mxu0 %v1321
    %1332 = vmatprep.subr.bf16.mxu0 0
    %1333 = vmatpush1.bf16.msra.mxu0 %v1320
    %1334 = vmatprep.subr.bf16.mxu0 0
    %1335 = vmatpush1.bf16.msra.mxu0 %v1319
    %1336 = vmatprep.subr.bf16.mxu0 0
    %1337 = vmatpush1.bf16.msra.mxu0 %v1318
    %1338 = vmatprep.subr.bf16.mxu0 0
    %1339 = vmatpush1.bf16.msra.mxu0 %v1317
    %1340 = vmatprep.subr.bf16.mxu0 0
    %1341 = vmatpush1.bf16.msra.mxu0 %v1316
    %1342 = vmatprep.subr.bf16.mxu0 0
    %1343 = vmatpush1.bf16.msra.mxu0 %v1315
    %1344 = vmatprep.subr.bf16.mxu0 0
    %1345 = vmatpush1.bf16.msra.mxu0 %v1314
    %1346 = vmatprep.subr.bf16.mxu0 0
    %1347 = vmatpush2.bf16.msra.mxu0 0
    %1348 = vmatprep.subr.bf16.mxu0 0
    %1349 = vmatpush2.bf16.msra.mxu0 0
    %1350 = vmatprep.subr.bf16.mxu0 0
    %1351 = vmatpush2.bf16.msra.mxu0 0
    %1352 = vmatprep.subr.bf16.mxu0 0
    %1353 = vmatpush2.bf16.msra.mxu0 0
    %1354 = vmatprep.subr.bf16.mxu0 0
    %1355 = vmatpush2.bf16.msra.mxu0 0
    %1356 = vmatprep.subr.bf16.mxu0 0
    %1357 = vmatpush2.bf16.msra.mxu0 0
    %1358 = vmatprep.subr.bf16.mxu0 0
    %1359 = vmatpush2.bf16.msra.mxu0 0
    %1360 = vmatprep.subr.bf16.mxu0 0
    %1361 = vmatpush2.bf16.msra.mxu0 0
    %1362 = vmatprep.mubr.bf16.mxu0 0
    %1363 = vmatmul.mubr.bf16.gmra.mxu0 %v1264
    %v1364 = vpop.f32.mrf.mxu0
    %v1365 = vadd.f32 0.0, %v1364
    %v1366 = vpop.f32.mrf.mxu0
    %v1367 = vpop.f32.mrf.mxu0
    %v1368 = vadd.f32 0.0, %v1367
    %v1369 = vpop.f32.mrf.mxu0
    %1370 = vdwg.mxu0
    %v1387 = vunpack.c.l.b16 %v733
    %v1388 = vunpack.c.l.b16 %v734
    %v1389 = vunpack.c.l.b16 %v735
    %v1390 = vunpack.c.l.b16 %v736
    %v1391 = vunpack.c.l.b16 %v737
    %v1392 = vunpack.c.l.b16 %v738
    %v1393 = vunpack.c.l.b16 %v739
    %v1394 = vunpack.c.l.b16 %v740
    %v1395 = vunpack.c.l.b16 %v741
    %v1396 = vunpack.c.l.b16 %v742
    %v1397 = vunpack.c.l.b16 %v743
    %v1398 = vunpack.c.l.b16 %v744
    %v1399 = vunpack.c.l.b16 %v745
    %v1400 = vunpack.c.l.b16 %v746
    %v1401 = vunpack.c.l.b16 %v747
    %v1402 = vunpack.c.l.b16 %v748
    %v1403 = vpack.c.b16 %v1388, %v1387
    %v1404 = vpack.c.b16 %v1390, %v1389
    %v1405 = vpack.c.b16 %v1392, %v1391
    %v1406 = vpack.c.b16 %v1394, %v1393
    %v1407 = vpack.c.b16 %v1396, %v1395
    %v1408 = vpack.c.b16 %v1398, %v1397
    %v1409 = vpack.c.b16 %v1400, %v1399
    %v1410 = vpack.c.b16 %v1402, %v1401
    %1419 = vmatprep.subr.bf16.mxu0 0
    %1420 = vmatpush1.bf16.msra.mxu0 %v1410
    %1421 = vmatprep.subr.bf16.mxu0 0
    %1422 = vmatpush1.bf16.msra.mxu0 %v1409
    %1423 = vmatprep.subr.bf16.mxu0 0
    %1424 = vmatpush1.bf16.msra.mxu0 %v1408
    %1425 = vmatprep.subr.bf16.mxu0 0
    %1426 = vmatpush1.bf16.msra.mxu0 %v1407
    %1427 = vmatprep.subr.bf16.mxu0 0
    %1428 = vmatpush1.bf16.msra.mxu0 %v1406
    %1429 = vmatprep.subr.bf16.mxu0 0
    %1430 = vmatpush1.bf16.msra.mxu0 %v1405
    %1431 = vmatprep.subr.bf16.mxu0 0
    %1432 = vmatpush1.bf16.msra.mxu0 %v1404
    %1433 = vmatprep.subr.bf16.mxu0 0
    %1434 = vmatpush1.bf16.msra.mxu0 %v1403
    %1435 = vmatprep.subr.bf16.mxu0 0
    %1436 = vmatpush2.bf16.msra.mxu0 0
    %1437 = vmatprep.subr.bf16.mxu0 0
    %1438 = vmatpush2.bf16.msra.mxu0 0
    %1439 = vmatprep.subr.bf16.mxu0 0
    %1440 = vmatpush2.bf16.msra.mxu0 0
    %1441 = vmatprep.subr.bf16.mxu0 0
    %1442 = vmatpush2.bf16.msra.mxu0 0
    %1443 = vmatprep.subr.bf16.mxu0 0
    %1444 = vmatpush2.bf16.msra.mxu0 0
    %1445 = vmatprep.subr.bf16.mxu0 0
    %1446 = vmatpush2.bf16.msra.mxu0 0
    %1447 = vmatprep.subr.bf16.mxu0 0
    %1448 = vmatpush2.bf16.msra.mxu0 0
    %1449 = vmatprep.subr.bf16.mxu0 0
    %1450 = vmatpush2.bf16.msra.mxu0 0
    %1451 = vmatprep.mubr.bf16.mxu0 0
    %1452 = vmatmul.mubr.bf16.gmra.mxu0 %v731
    %v1453 = vpop.f32.mrf.mxu0
    %v1454 = vadd.f32 %v1365, %v1453
    %v1455 = vpop.f32.mrf.mxu0
    %v1456 = vpop.f32.mrf.mxu0
    %v1457 = vadd.f32 %v1368, %v1456
    %v1458 = vpop.f32.mrf.mxu0
    %1459 = vdwg.mxu0
    %v1460 = vld [vmem:[#allocation2 + $0x6] sm:$0x1]
    %v1461 = vlaneseq
    %v1462 = vshrl.u32 %v1461, 7
    %v1463 = vsub.s32 0, %v1462
    %v1464 = vrot.slane %v1460, %v1463
    %v1465 = vadd.f32 %v1454, %v1464
    %v1466 = vadd.f32 %v1457, %v1464
    %v1467 = vadd.f32 %v210, %v1465
    %v1468 = vadd.f32 %v211, %v1466
    %1469 = vadd.xlane.f32.xlu0 %v1467
    %v1470 = vpop.xlane.xlu0 %1469
    %1471 = vadd.xlane.f32.xlu0 %v1468
    %v1472 = vpop.xlane.xlu0 %1471
    %v1473 = vmul.f32 %v1470, 0.03125
    %v1474 = vmul.f32 %v1472, 0.03125
    %v1475 = vsub.f32 %v1467, %v1473
    %v1476 = vsub.f32 %v1468, %v1474
    %v1477 = vmul.f32 %v1475, %v51
    %v1478 = vmul.f32 %v1476, %v51
    %v1479 = vmul.f32 %v1477, %v1477
    %v1480 = vmul.f32 %v1478, %v1478
    %1481 = vadd.xlane.f32.xlu0 %v1479
    %v1482 = vpop.xlane.xlu0 %1481
    %1483 = vadd.xlane.f32.xlu0 %v1480
    %v1484 = vpop.xlane.xlu0 %1483
    %v1485 = vmul.f32 %v1482, 0.03125
    %v1486 = vmul.f32 %v1484, 0.03125
    %v1487 = vadd.f32 %v1485, 1e-12
    %v1488 = vadd.f32 %v1486, 1e-12
    %v1489 = vrsqrt.pop %v1487
    %v1490 = vrsqrt.pop %v1488
    %v1491 = vmul.f32 %v1477, %v1489
    %v1492 = vmul.f32 %v1478, %v1490
    %v1493 = vld [vmem:[#allocation2 + $0x2] sm:$0x1]
    %v1494 = vlaneseq
    %v1495 = vshrl.u32 %v1494, 7
    %v1496 = vsub.s32 0, %v1495
    %v1497 = vrot.slane %v1493, %v1496
    %v1498 = vmul.f32 %v1491, %v1497
    %v1499 = vmul.f32 %v1492, %v1497
    %v1500 = vld [vmem:[#allocation2 + $0x3] sm:$0x1]
    %v1501 = vlaneseq
    %v1502 = vshrl.u32 %v1501, 7
    %v1503 = vsub.s32 0, %v1502
    %v1504 = vrot.slane %v1500, %v1503
    %v1505 = vadd.f32 %v1498, %v1504
    %v1506 = vadd.f32 %v1499, %v1504
    %v1507 = vpack.c.bf16 %v1506, %v1505
    %s1508 = scalar_lea.vmem [#allocation5], 576
    %v1509 = vld [vmem:[%s1508] sm:$0xf]
    %v1510 = vld [vmem:[%s1508 + $0x4] sm:$0xf]
    %v1511 = vld [vmem:[%s1508 + $0x8] sm:$0xf]
    %v1512 = vld [vmem:[%s1508 + $0xc] sm:$0xf]
    %v1513 = vld [vmem:[%s1508 + $0x10] sm:$0xf]
    %v1514 = vld [vmem:[%s1508 + $0x14] sm:$0xf]
    %v1515 = vld [vmem:[%s1508 + $0x18] sm:$0xf]
    %v1516 = vld [vmem:[%s1508 + $0x1c] sm:$0xf]
    %v1517 = vld [vmem:[%s1508 + $0x20] sm:$0xf]
    %v1518 = vld [vmem:[%s1508 + $0x24] sm:$0xf]
    %v1519 = vld [vmem:[%s1508 + $0x28] sm:$0xf]
    %v1520 = vld [vmem:[%s1508 + $0x2c] sm:$0xf]
    %v1521 = vld [vmem:[%s1508 + $0x30] sm:$0xf]
    %v1522 = vld [vmem:[%s1508 + $0x34] sm:$0xf]
    %v1523 = vld [vmem:[%s1508 + $0x38] sm:$0xf]
    %v1524 = vld [vmem:[%s1508 + $0x3c] sm:$0xf]
    %v1525 = vld [vmem:[#allocation2 + $0x7] sm:$0x1]
    %v1526 = vlaneseq
    %v1527 = vshrl.u32 %v1526, 7
    %v1528 = vsub.s32 0, %v1527
    %v1529 = vrot.slane %v1525, %v1528
    %v1546 = vunpack.c.l.b16 %v1509
    %v1547 = vunpack.c.l.b16 %v1510
    %v1548 = vunpack.c.l.b16 %v1511
    %v1549 = vunpack.c.l.b16 %v1512
    %v1550 = vunpack.c.l.b16 %v1513
    %v1551 = vunpack.c.l.b16 %v1514
    %v1552 = vunpack.c.l.b16 %v1515
    %v1553 = vunpack.c.l.b16 %v1516
    %v1554 = vunpack.c.l.b16 %v1517
    %v1555 = vunpack.c.l.b16 %v1518
    %v1556 = vunpack.c.l.b16 %v1519
    %v1557 = vunpack.c.l.b16 %v1520
    %v1558 = vunpack.c.l.b16 %v1521
    %v1559 = vunpack.c.l.b16 %v1522
    %v1560 = vunpack.c.l.b16 %v1523
    %v1561 = vunpack.c.l.b16 %v1524
    %v1562 = vpack.c.b16 %v1547, %v1546
    %v1563 = vpack.c.b16 %v1549, %v1548
    %v1564 = vpack.c.b16 %v1551, %v1550
    %v1565 = vpack.c.b16 %v1553, %v1552
    %v1566 = vpack.c.b16 %v1555, %v1554
    %v1567 = vpack.c.b16 %v1557, %v1556
    %v1568 = vpack.c.b16 %v1559, %v1558
    %v1569 = vpack.c.b16 %v1561, %v1560
    %1578 = vmatprep.subr.bf16.mxu0 0
    %1579 = vmatpush1.bf16.msra.mxu0 %v1569
    %1580 = vmatprep.subr.bf16.mxu0 0
    %1581 = vmatpush1.bf16.msra.mxu0 %v1568
    %1582 = vmatprep.subr.bf16.mxu0 0
    %1583 = vmatpush1.bf16.msra.mxu0 %v1567
    %1584 = vmatprep.subr.bf16.mxu0 0
    %1585 = vmatpush1.bf16.msra.mxu0 %v1566
    %1586 = vmatprep.subr.bf16.mxu0 0
    %1587 = vmatpush1.bf16.msra.mxu0 %v1565
    %1588 = vmatprep.subr.bf16.mxu0 0
    %1589 = vmatpush1.bf16.msra.mxu0 %v1564
    %1590 = vmatprep.subr.bf16.mxu0 0
    %1591 = vmatpush1.bf16.msra.mxu0 %v1563
    %1592 = vmatprep.subr.bf16.mxu0 0
    %1593 = vmatpush1.bf16.msra.mxu0 %v1562
    %1594 = vmatprep.subr.bf16.mxu0 0
    %1595 = vmatpush2.bf16.msra.mxu0 0
    %1596 = vmatprep.subr.bf16.mxu0 0
    %1597 = vmatpush2.bf16.msra.mxu0 0
    %1598 = vmatprep.subr.bf16.mxu0 0
    %1599 = vmatpush2.bf16.msra.mxu0 0
    %1600 = vmatprep.subr.bf16.mxu0 0
    %1601 = vmatpush2.bf16.msra.mxu0 0
    %1602 = vmatprep.subr.bf16.mxu0 0
    %1603 = vmatpush2.bf16.msra.mxu0 0
    %1604 = vmatprep.subr.bf16.mxu0 0
    %1605 = vmatpush2.bf16.msra.mxu0 0
    %1606 = vmatprep.subr.bf16.mxu0 0
    %1607 = vmatpush2.bf16.msra.mxu0 0
    %1608 = vmatprep.subr.bf16.mxu0 0
    %1609 = vmatpush2.bf16.msra.mxu0 0
    %1610 = vmatprep.mubr.bf16.mxu0 0
    %1611 = vmatmul.mubr.bf16.gmra.mxu0 %v1507
    %v1612 = vpop.f32.mrf.mxu0
    %v1613 = vadd.f32 %v1529, %v1612
    %v1614 = vpop.f32.mrf.mxu0
    %v1615 = vpop.f32.mrf.mxu0
    %v1616 = vadd.f32 %v1529, %v1615
    %v1617 = vpop.f32.mrf.mxu0
    %1618 = vdwg.mxu0
    %v1619 = vmul.f32 %v1613, 0.5
    %v1620 = vmul.f32 %v1616, 0.5
    %v1621 = vmul.f32 %v1613, 0.044715
    %v1622 = vmul.f32 %v1616, 0.044715
    %v1623 = vmul.f32 %v1621, %v1613
    %v1624 = vmul.f32 %v1622, %v1616
    %v1625 = vmul.f32 %v1623, %v1613
    %v1626 = vmul.f32 %v1624, %v1616
    %v1627 = vadd.f32 %v1613, %v1625
    %v1628 = vadd.f32 %v1616, %v1626
    %v1629 = vmul.f32 %v1627, 0.7978846
    %v1630 = vmul.f32 %v1628, 0.7978846
    %v1631 = vtanh.pop %v1629
    %v1632 = vtanh.pop %v1630
    %v1633 = vadd.f32 %v1631, 1.0
    %v1634 = vadd.f32 %v1632, 1.0
    %v1635 = vmul.f32 %v1619, %v1633
    %v1636 = vmul.f32 %v1620, %v1634
    %v1637 = vpack.c.bf16 %v1636, %v1635
    %s1638 = scalar_lea.vmem [#allocation5], 640
    %v1639 = vld [vmem:[%s1638] sm:$0xf]
    %v1640 = vld [vmem:[%s1638 + $0x4] sm:$0xf]
    %v1641 = vld [vmem:[%s1638 + $0x8] sm:$0xf]
    %v1642 = vld [vmem:[%s1638 + $0xc] sm:$0xf]
    %v1643 = vld [vmem:[%s1638 + $0x10] sm:$0xf]
    %v1644 = vld [vmem:[%s1638 + $0x14] sm:$0xf]
    %v1645 = vld [vmem:[%s1638 + $0x18] sm:$0xf]
    %v1646 = vld [vmem:[%s1638 + $0x1c] sm:$0xf]
    %v1647 = vld [vmem:[%s1638 + $0x20] sm:$0xf]
    %v1648 = vld [vmem:[%s1638 + $0x24] sm:$0xf]
    %v1649 = vld [vmem:[%s1638 + $0x28] sm:$0xf]
    %v1650 = vld [vmem:[%s1638 + $0x2c] sm:$0xf]
    %v1651 = vld [vmem:[%s1638 + $0x30] sm:$0xf]
    %v1652 = vld [vmem:[%s1638 + $0x34] sm:$0xf]
    %v1653 = vld [vmem:[%s1638 + $0x38] sm:$0xf]
    %v1654 = vld [vmem:[%s1638 + $0x3c] sm:$0xf]
    %v1655 = vld [vmem:[#allocation2 + $0x8] sm:$0x1]
    %v1656 = vlaneseq
    %v1657 = vshrl.u32 %v1656, 7
    %v1658 = vsub.s32 0, %v1657
    %v1659 = vrot.slane %v1655, %v1658
    %v1676 = vunpack.c.l.b16 %v1639
    %v1677 = vunpack.c.l.b16 %v1640
    %v1678 = vunpack.c.l.b16 %v1641
    %v1679 = vunpack.c.l.b16 %v1642
    %v1680 = vunpack.c.l.b16 %v1643
    %v1681 = vunpack.c.l.b16 %v1644
    %v1682 = vunpack.c.l.b16 %v1645
    %v1683 = vunpack.c.l.b16 %v1646
    %v1684 = vunpack.c.l.b16 %v1647
    %v1685 = vunpack.c.l.b16 %v1648
    %v1686 = vunpack.c.l.b16 %v1649
    %v1687 = vunpack.c.l.b16 %v1650
    %v1688 = vunpack.c.l.b16 %v1651
    %v1689 = vunpack.c.l.b16 %v1652
    %v1690 = vunpack.c.l.b16 %v1653
    %v1691 = vunpack.c.l.b16 %v1654
    %v1692 = vpack.c.b16 %v1677, %v1676
    %v1693 = vpack.c.b16 %v1679, %v1678
    %v1694 = vpack.c.b16 %v1681, %v1680
    %v1695 = vpack.c.b16 %v1683, %v1682
    %v1696 = vpack.c.b16 %v1685, %v1684
    %v1697 = vpack.c.b16 %v1687, %v1686
    %v1698 = vpack.c.b16 %v1689, %v1688
    %v1699 = vpack.c.b16 %v1691, %v1690
    %1708 = vmatprep.subr.bf16.mxu0 0
    %1709 = vmatpush1.bf16.msra.mxu0 %v1699
    %1710 = vmatprep.subr.bf16.mxu0 0
    %1711 = vmatpush1.bf16.msra.mxu0 %v1698
    %1712 = vmatprep.subr.bf16.mxu0 0
    %1713 = vmatpush1.bf16.msra.mxu0 %v1697
    %1714 = vmatprep.subr.bf16.mxu0 0
    %1715 = vmatpush1.bf16.msra.mxu0 %v1696
    %1716 = vmatprep.subr.bf16.mxu0 0
    %1717 = vmatpush1.bf16.msra.mxu0 %v1695
    %1718 = vmatprep.subr.bf16.mxu0 0
    %1719 = vmatpush1.bf16.msra.mxu0 %v1694
    %1720 = vmatprep.subr.bf16.mxu0 0
    %1721 = vmatpush1.bf16.msra.mxu0 %v1693
    %1722 = vmatprep.subr.bf16.mxu0 0
    %1723 = vmatpush1.bf16.msra.mxu0 %v1692
    %1724 = vmatprep.subr.bf16.mxu0 0
    %1725 = vmatpush2.bf16.msra.mxu0 0
    %1726 = vmatprep.subr.bf16.mxu0 0
    %1727 = vmatpush2.bf16.msra.mxu0 0
    %1728 = vmatprep.subr.bf16.mxu0 0
    %1729 = vmatpush2.bf16.msra.mxu0 0
    %1730 = vmatprep.subr.bf16.mxu0 0
    %1731 = vmatpush2.bf16.msra.mxu0 0
    %1732 = vmatprep.subr.bf16.mxu0 0
    %1733 = vmatpush2.bf16.msra.mxu0 0
    %1734 = vmatprep.subr.bf16.mxu0 0
    %1735 = vmatpush2.bf16.msra.mxu0 0
    %1736 = vmatprep.subr.bf16.mxu0 0
    %1737 = vmatpush2.bf16.msra.mxu0 0
    %1738 = vmatprep.subr.bf16.mxu0 0
    %1739 = vmatpush2.bf16.msra.mxu0 0
    %1740 = vmatprep.mubr.bf16.mxu0 0
    %1741 = vmatmul.mubr.bf16.gmra.mxu0 %v1637
    %v1742 = vpop.f32.mrf.mxu0
    %v1743 = vadd.f32 %v1659, %v1742
    %v1744 = vpop.f32.mrf.mxu0
    %v1745 = vpop.f32.mrf.mxu0
    %v1746 = vadd.f32 %v1659, %v1745
    %v1747 = vpop.f32.mrf.mxu0
    %1748 = vdwg.mxu0
    %v1749 = vadd.f32 %v1505, %v1743
    %v1750 = vadd.f32 %v1506, %v1746
    %1751 = vadd.xlane.f32.xlu0 %v1749
    %v1752 = vpop.xlane.xlu0 %1751
    %1753 = vadd.xlane.f32.xlu0 %v1750
    %v1754 = vpop.xlane.xlu0 %1753
    %v1755 = vmul.f32 %v1752, 0.03125
    %v1756 = vmul.f32 %v1754, 0.03125
    %v1757 = vsub.f32 %v1749, %v1755
    %v1758 = vsub.f32 %v1750, %v1756
    %v1759 = vmul.f32 %v1757, %v51
    %v1760 = vmul.f32 %v1758, %v51
    %v1761 = vmul.f32 %v1759, %v1759
    %v1762 = vmul.f32 %v1760, %v1760
    %1763 = vadd.xlane.f32.xlu0 %v1761
    %v1764 = vpop.xlane.xlu0 %1763
    %1765 = vadd.xlane.f32.xlu0 %v1762
    %v1766 = vpop.xlane.xlu0 %1765
    %v1767 = vmul.f32 %v1764, 0.03125
    %v1768 = vmul.f32 %v1766, 0.03125
    %v1769 = vadd.f32 %v1767, 1e-12
    %v1770 = vadd.f32 %v1768, 1e-12
    %v1771 = vrsqrt.pop %v1769
    %v1772 = vrsqrt.pop %v1770
    %v1773 = vmul.f32 %v1759, %v1771
    %v1774 = vmul.f32 %v1760, %v1772
    %v1775 = vld [vmem:[#allocation2 + $0x4] sm:$0x1]
    %v1776 = vlaneseq
    %v1777 = vshrl.u32 %v1776, 7
    %v1778 = vsub.s32 0, %v1777
    %v1779 = vrot.slane %v1775, %v1778
    %v1780 = vmul.f32 %v1773, %v1779
    %v1781 = vmul.f32 %v1774, %v1779
    %v1782 = vld [vmem:[#allocation2 + $0x5] sm:$0x1]
    %v1783 = vlaneseq
    %v1784 = vshrl.u32 %v1783, 7
    %v1785 = vsub.s32 0, %v1784
    %v1786 = vrot.slane %v1782, %v1785
    %v1787 = vadd.f32 %v1780, %v1786
    %v1788 = vadd.f32 %v1781, %v1786
    %v1789 = vlaneseq
    %v1790 = vshrl.u32 %v1789, 7
    %v1791 = vmul.u32 %v1790, 8
    %vm1792 = vcmp.eq.s32.totalorder %v48, %v1791
    %vm1793 = vcmp.lt.s32.totalorder %v1790, 2
    %vm1794 = vmand %vm1792, %vm1793
    %v1795 = vsel %vm1794, 1, 0
    %v1796 = vcvt.s32.f32 %v1795
    %v1797 = vpack.c.bf16 %v1796, %v1796
    %v1798 = vpack.c.bf16 %v1788, %v1787
    %v1800 = vsel %vm627, %v1797, 0
    %1802 = vmatprep.subr.bf16.mxu0 0
    %1803 = vmatpush1.bf16.msra.mxu0 0
    %1804 = vmatprep.subr.bf16.mxu0 0
    %1805 = vmatpush1.bf16.msra.mxu0 0
    %1806 = vmatprep.subr.bf16.mxu0 0
    %1807 = vmatpush1.bf16.msra.mxu0 0
    %1808 = vmatprep.subr.bf16.mxu0 0
    %1809 = vmatpush1.bf16.msra.mxu0 0
    %1810 = vmatprep.subr.bf16.mxu0 0
    %1811 = vmatpush1.bf16.msra.mxu0 0
    %1812 = vmatprep.subr.bf16.mxu0 0
    %1813 = vmatpush1.bf16.msra.mxu0 0
    %1814 = vmatprep.subr.bf16.mxu0 0
    %1815 = vmatpush1.bf16.msra.mxu0 0
    %1816 = vmatprep.subr.bf16.mxu0 0
    %1817 = vmatpush1.bf16.msra.mxu0 %v1798
    %1818 = vmatprep.subr.bf16.mxu0 0
    %1819 = vmatpush2.bf16.msra.mxu0 0
    %1820 = vmatprep.subr.bf16.mxu0 0
    %1821 = vmatpush2.bf16.msra.mxu0 0
    %1822 = vmatprep.subr.bf16.mxu0 0
    %1823 = vmatpush2.bf16.msra.mxu0 0
    %1824 = vmatprep.subr.bf16.mxu0 0
    %1825 = vmatpush2.bf16.msra.mxu0 0
    %1826 = vmatprep.subr.bf16.mxu0 0
    %1827 = vmatpush2.bf16.msra.mxu0 0
    %1828 = vmatprep.subr.bf16.mxu0 0
    %1829 = vmatpush2.bf16.msra.mxu0 0
    %1830 = vmatprep.subr.bf16.mxu0 0
    %1831 = vmatpush2.bf16.msra.mxu0 0
    %1832 = vmatprep.subr.bf16.mxu0 0
    %1833 = vmatpush2.bf16.msra.mxu0 0
    %1834 = vmatprep.mubr.bf16.mxu0 0
    %1835 = vmatmul.mubr.bf16.gmra.mxu0 %v1800
    %v1836 = vpop.f32.mrf.mxu0
    %v1837 = vadd.f32 0.0, %v1836
    %v1838 = vpop.f32.mrf.mxu0
    %v1839 = vpop.f32.mrf.mxu0
    %v1840 = vpop.f32.mrf.mxu0
    %1841 = vdwg.mxu0
    %v1842 = vpack.c.bf16 %v1837, %v1837
    %s1843 = scalar_lea.vmem [#allocation5], 704
    %v1844 = vld [vmem:[%s1843] sm:$0xf]
    %v1845 = vld [vmem:[%s1843 + $0x4] sm:$0xf]
    %v1846 = vld [vmem:[%s1843 + $0x8] sm:$0xf]
    %v1847 = vld [vmem:[%s1843 + $0xc] sm:$0xf]
    %v1848 = vld [vmem:[%s1843 + $0x10] sm:$0xf]
    %v1849 = vld [vmem:[%s1843 + $0x14] sm:$0xf]
    %v1850 = vld [vmem:[%s1843 + $0x18] sm:$0xf]
    %v1851 = vld [vmem:[%s1843 + $0x1c] sm:$0xf]
    %v1852 = vld [vmem:[%s1843 + $0x20] sm:$0xf]
    %v1853 = vld [vmem:[%s1843 + $0x24] sm:$0xf]
    %v1854 = vld [vmem:[%s1843 + $0x28] sm:$0xf]
    %v1855 = vld [vmem:[%s1843 + $0x2c] sm:$0xf]
    %v1856 = vld [vmem:[%s1843 + $0x30] sm:$0xf]
    %v1857 = vld [vmem:[%s1843 + $0x34] sm:$0xf]
    %v1858 = vld [vmem:[%s1843 + $0x38] sm:$0xf]
    %v1859 = vld [vmem:[%s1843 + $0x3c] sm:$0xf]
    %v1860 = vld [vmem:[#allocation2 + $0x9] sm:$0x1]
    %v1861 = vlaneseq
    %v1862 = vshrl.u32 %v1861, 7
    %v1863 = vsub.s32 0, %v1862
    %v1864 = vrot.slane %v1860, %v1863
    %v1881 = vunpack.c.l.b16 %v1844
    %v1882 = vunpack.c.l.b16 %v1845
    %v1883 = vunpack.c.l.b16 %v1846
    %v1884 = vunpack.c.l.b16 %v1847
    %v1885 = vunpack.c.l.b16 %v1848
    %v1886 = vunpack.c.l.b16 %v1849
    %v1887 = vunpack.c.l.b16 %v1850
    %v1888 = vunpack.c.l.b16 %v1851
    %v1889 = vunpack.c.l.b16 %v1852
    %v1890 = vunpack.c.l.b16 %v1853
    %v1891 = vunpack.c.l.b16 %v1854
    %v1892 = vunpack.c.l.b16 %v1855
    %v1893 = vunpack.c.l.b16 %v1856
    %v1894 = vunpack.c.l.b16 %v1857
    %v1895 = vunpack.c.l.b16 %v1858
    %v1896 = vunpack.c.l.b16 %v1859
    %v1897 = vpack.c.b16 %v1882, %v1881
    %v1898 = vpack.c.b16 %v1884, %v1883
    %v1899 = vpack.c.b16 %v1886, %v1885
    %v1900 = vpack.c.b16 %v1888, %v1887
    %v1901 = vpack.c.b16 %v1890, %v1889
    %v1902 = vpack.c.b16 %v1892, %v1891
    %v1903 = vpack.c.b16 %v1894, %v1893
    %v1904 = vpack.c.b16 %v1896, %v1895
    %1913 = vmatprep.subr.bf16.mxu0 0
    %1914 = vmatpush1.bf16.msra.mxu0 %v1904
    %1915 = vmatprep.subr.bf16.mxu0 0
    %1916 = vmatpush1.bf16.msra.mxu0 %v1903
    %1917 = vmatprep.subr.bf16.mxu0 0
    %1918 = vmatpush1.bf16.msra.mxu0 %v1902
    %1919 = vmatprep.subr.bf16.mxu0 0
    %1920 = vmatpush1.bf16.msra.mxu0 %v1901
    %1921 = vmatprep.subr.bf16.mxu0 0
    %1922 = vmatpush1.bf16.msra.mxu0 %v1900
    %1923 = vmatprep.subr.bf16.mxu0 0
    %1924 = vmatpush1.bf16.msra.mxu0 %v1899
    %1925 = vmatprep.subr.bf16.mxu0 0
    %1926 = vmatpush1.bf16.msra.mxu0 %v1898
    %1927 = vmatprep.subr.bf16.mxu0 0
    %1928 = vmatpush1.bf16.msra.mxu0 %v1897
    %1929 = vmatprep.subr.bf16.mxu0 0
    %1930 = vmatpush2.bf16.msra.mxu0 0
    %1931 = vmatprep.subr.bf16.mxu0 0
    %1932 = vmatpush2.bf16.msra.mxu0 0
    %1933 = vmatprep.subr.bf16.mxu0 0
    %1934 = vmatpush2.bf16.msra.mxu0 0
    %1935 = vmatprep.subr.bf16.mxu0 0
    %1936 = vmatpush2.bf16.msra.mxu0 0
    %1937 = vmatprep.subr.bf16.mxu0 0
    %1938 = vmatpush2.bf16.msra.mxu0 0
    %1939 = vmatprep.subr.bf16.mxu0 0
    %1940 = vmatpush2.bf16.msra.mxu0 0
    %1941 = vmatprep.subr.bf16.mxu0 0
    %1942 = vmatpush2.bf16.msra.mxu0 0
    %1943 = vmatprep.subr.bf16.mxu0 0
    %1944 = vmatpush2.bf16.msra.mxu0 0
    %1945 = vmatprep.mubr.bf16.mxu0 0
    %1946 = vmatmul.mubr.bf16.gmra.mxu0 %v1842
    %v1947 = vpop.f32.mrf.mxu0
    %v1948 = vadd.f32 %v1864, %v1947
    %v1949 = vpop.f32.mrf.mxu0
    %v1950 = vpop.f32.mrf.mxu0
    %v1951 = vpop.f32.mrf.mxu0
    %1952 = vdwg.mxu0
    %v1953 = vtanh.pop %v1948
    %v1954 = vpack.c.bf16 %v1953, %v1953
    %s1955 = scalar_lea.vmem [#allocation5], 768
    %v1956 = vld [vmem:[%s1955] sm:$0xf]
    %v1957 = vld [vmem:[%s1955 + $0x4] sm:$0xf]
    %v1958 = vld [vmem:[%s1955 + $0x8] sm:$0xf]
    %v1959 = vld [vmem:[%s1955 + $0xc] sm:$0xf]
    %v1960 = vld [vmem:[%s1955 + $0x10] sm:$0xf]
    %v1961 = vld [vmem:[%s1955 + $0x14] sm:$0xf]
    %v1962 = vld [vmem:[%s1955 + $0x18] sm:$0xf]
    %v1963 = vld [vmem:[%s1955 + $0x1c] sm:$0xf]
    %v1964 = vld [vmem:[%s1955 + $0x20] sm:$0xf]
    %v1965 = vld [vmem:[%s1955 + $0x24] sm:$0xf]
    %v1966 = vld [vmem:[%s1955 + $0x28] sm:$0xf]
    %v1967 = vld [vmem:[%s1955 + $0x2c] sm:$0xf]
    %v1968 = vld [vmem:[%s1955 + $0x30] sm:$0xf]
    %v1969 = vld [vmem:[%s1955 + $0x34] sm:$0xf]
    %v1970 = vld [vmem:[%s1955 + $0x38] sm:$0xf]
    %v1971 = vld [vmem:[%s1955 + $0x3c] sm:$0xf]
    %v1972 = vld [vmem:[#allocation2 + $0xa] sm:$0x1]
    %v1973 = vlaneseq
    %v1974 = vshrl.u32 %v1973, 7
    %v1975 = vsub.s32 0, %v1974
    %v1976 = vrot.slane %v1972, %v1975
    %v1993 = vunpack.c.l.b16 %v1956
    %v1994 = vunpack.c.l.b16 %v1957
    %v1995 = vunpack.c.l.b16 %v1958
    %v1996 = vunpack.c.l.b16 %v1959
    %v1997 = vunpack.c.l.b16 %v1960
    %v1998 = vunpack.c.l.b16 %v1961
    %v1999 = vunpack.c.l.b16 %v1962
    %v2000 = vunpack.c.l.b16 %v1963
    %v2001 = vunpack.c.l.b16 %v1964
    %v2002 = vunpack.c.l.b16 %v1965
    %v2003 = vunpack.c.l.b16 %v1966
    %v2004 = vunpack.c.l.b16 %v1967
    %v2005 = vunpack.c.l.b16 %v1968
    %v2006 = vunpack.c.l.b16 %v1969
    %v2007 = vunpack.c.l.b16 %v1970
    %v2008 = vunpack.c.l.b16 %v1971
    %v2009 = vpack.c.b16 %v1994, %v1993
    %v2010 = vpack.c.b16 %v1996, %v1995
    %v2011 = vpack.c.b16 %v1998, %v1997
    %v2012 = vpack.c.b16 %v2000, %v1999
    %v2013 = vpack.c.b16 %v2002, %v2001
    %v2014 = vpack.c.b16 %v2004, %v2003
    %v2015 = vpack.c.b16 %v2006, %v2005
    %v2016 = vpack.c.b16 %v2008, %v2007
    %2025 = vmatprep.subr.bf16.mxu0 0
    %2026 = vmatpush1.bf16.msra.mxu0 %v2016
    %2027 = vmatprep.subr.bf16.mxu0 0
    %2028 = vmatpush1.bf16.msra.mxu0 %v2015
    %2029 = vmatprep.subr.bf16.mxu0 0
    %2030 = vmatpush1.bf16.msra.mxu0 %v2014
    %2031 = vmatprep.subr.bf16.mxu0 0
    %2032 = vmatpush1.bf16.msra.mxu0 %v2013
    %2033 = vmatprep.subr.bf16.mxu0 0
    %2034 = vmatpush1.bf16.msra.mxu0 %v2012
    %2035 = vmatprep.subr.bf16.mxu0 0
    %2036 = vmatpush1.bf16.msra.mxu0 %v2011
    %2037 = vmatprep.subr.bf16.mxu0 0
    %2038 = vmatpush1.bf16.msra.mxu0 %v2010
    %2039 = vmatprep.subr.bf16.mxu0 0
    %2040 = vmatpush1.bf16.msra.mxu0 %v2009
    %2041 = vmatprep.subr.bf16.mxu0 0
    %2042 = vmatpush2.bf16.msra.mxu0 0
    %2043 = vmatprep.subr.bf16.mxu0 0
    %2044 = vmatpush2.bf16.msra.mxu0 0
    %2045 = vmatprep.subr.bf16.mxu0 0
    %2046 = vmatpush2.bf16.msra.mxu0 0
    %2047 = vmatprep.subr.bf16.mxu0 0
    %2048 = vmatpush2.bf16.msra.mxu0 0
    %2049 = vmatprep.subr.bf16.mxu0 0
    %2050 = vmatpush2.bf16.msra.mxu0 0
    %2051 = vmatprep.subr.bf16.mxu0 0
    %2052 = vmatpush2.bf16.msra.mxu0 0
    %2053 = vmatprep.subr.bf16.mxu0 0
    %2054 = vmatpush2.bf16.msra.mxu0 0
    %2055 = vmatprep.subr.bf16.mxu0 0
    %2056 = vmatpush2.bf16.msra.mxu0 0
    %2057 = vmatprep.mubr.bf16.mxu0 0
    %2058 = vmatmul.mubr.bf16.gmra.mxu0 %v1954
    %v2059 = vpop.f32.mrf.mxu0
    %v2060 = vadd.f32 %v1976, %v2059
    %v2061 = vpop.f32.mrf.mxu0
    %v2062 = vpop.f32.mrf.mxu0
    %v2063 = vpop.f32.mrf.mxu0
    %2064 = vdwg.mxu0
    %2065 = vst [vmem:[#allocation7] sm:$0xff] %v2060
    // Predicated region
    $region26: #{tpu_custom_call.1} parent=1 // pred_check
      _
    $region27: #{tpu_custom_call.1} parent=1 // pred_check_branch
      %2067 = sbr.rel (0) target = $region29
    $region28: #{tpu_custom_call.1} parent=1 // pred_region
      %s2069 = ssub.s32 128, 128
      %2070 = vsyncadd [#allocation4], %s2069
      %s2072 = sshll.u32 [#allocation7], 4
      %s2073 = int_to_ptr.vmem [resolvable:$true] %s2072
      %2075 = dma.vmem_to_hbm [thread:$0]  %s2073, 128, %s4, [#allocation4]
    $region29: #{tpu_custom_call.1} parent=1 // pred_fallthru
      _
    // Predicated region
    $region30: #{tpu_custom_call.1} parent=1 // pred_check
      _
    $region31: #{tpu_custom_call.1} parent=1 // pred_check_branch
      %2077 = sbr.rel (0) target = $region33
    $region32: #{tpu_custom_call.1} parent=1 // pred_region
      %2078 = dma.done [#allocation4], 128
    $region33: #{tpu_custom_call.1} parent=1 // pred_fallthru
      _
    %2079 = vsyncpa [#allocation3], 1
    %2080 = vsyncpa [#allocation6], 1
    %2081 = vsyncpa [#allocation4], 1

</llo_original>
